<compile_context>
chip_gen: v5e
topology: v5e:2x2
jax: 0.10.0
libtpu: 0.0.40
codegen_flags: <defaults>
</compile_context>

<pallas_src>
import functools
import math

import jax
import jax.numpy as jnp
from jax.experimental import pallas as pl
from jax.experimental.pallas import tpu as pltpu


def _transformer_layer_kernel(x_ref, wqkv_ref, bqkv_ref, wo_ref, bo_ref, wff_ref,
                              o_ref, *, num_heads):
    """Fused TransformerLayer forward for one batch element.

    x_ref    : (1, L, C)   tokens (native dtype; residuals stay in f32)
    wqkv_ref : (3, C, C)   folded [scale*Wq^T@Wiq^T, Wk^T@Wik^T, Wv^T@Wiv^T]   (bf16)
    bqkv_ref : (3, 1, C)   [scale*b_iq, b_ik, b_iv]                            (f32)
    wo_ref   : (H, dh, C)  out_proj.weight^T split per head                    (bf16)
    bo_ref   : (1, C)      out_proj.bias                                       (f32)
    wff_ref  : (C, C)      folded fc1.weight^T @ fc2.weight^T                  (bf16)
    o_ref    : (1, L, C)   output
    """
    cdt = wqkv_ref.dtype                      # MXU operand dtype (bf16)
    xb = x_ref[0]                             # (L, C)
    x32 = xb.astype(jnp.float32)              # residual path
    xc = xb.astype(cdt)                       # matmul operand
    L, C = xb.shape
    H = num_heads
    dh = C // H

    def proj(i):                              # fused q/k/v projection (1 matmul each)
        h = jnp.dot(xc, wqkv_ref[i], preferred_element_type=jnp.float32)
        return (h + bqkv_ref[i]).astype(cdt)  # (L, C) bf16

    def heads(t):                             # (L, C) -> (H, L, dh)
        return jnp.transpose(t.reshape(L, H, dh), (1, 0, 2))

    qh = heads(proj(0))
    kh = heads(proj(1))
    vh = heads(proj(2))

    # Batched-over-heads attention; 1/sqrt(dh) already folded into the q weights/bias.
    s = jnp.einsum('hqd,hkd->hqk', qh, kh,
                   preferred_element_type=jnp.float32)            # (H, L, L) f32
    s = s - jnp.max(s, axis=-1, keepdims=True)
    p = jnp.exp(s)
    inv_l = pl.reciprocal(jnp.sum(p, axis=-1, keepdims=True), approx=True)
    o = jnp.einsum('hqk,hkd->hqd', p.astype(cdt), vh,
                   preferred_element_type=jnp.float32)            # (H, L, dh) f32
    o = (o * inv_l).astype(cdt)               # deferred softmax normalization

    # Head-merge folded into the out projection: sum_h o_h @ Wo[h]  (no concatenate).
    attn = jnp.einsum('hqd,hdc->hqc', o, wo_ref[...],
                      preferred_element_type=jnp.float32).sum(axis=0)   # (L, C) f32
    x1 = attn + bo_ref[...] + x32             # residual 1 (f32)

    y = jnp.dot(x1.astype(cdt), wff_ref[...],
                preferred_element_type=jnp.float32)               # fused fc1+fc2
    o_ref[0] = (y + x1).astype(o_ref.dtype)   # residual 2


def _build_specs(L, C, H, dh, single_buffer_weights):
    wkw = dict(pipeline_mode=pl.Buffered(1)) if single_buffer_weights else {}
    in_specs = [
        pl.BlockSpec((1, L, C), lambda n: (n, 0, 0)),            # x (per-batch block)
        pl.BlockSpec((3, C, C), lambda n: (0, 0, 0), **wkw),     # fused q/k/v weights
        pl.BlockSpec((3, 1, C), lambda n: (0, 0, 0), **wkw),     # fused q/k/v biases
        pl.BlockSpec((H, dh, C), lambda n: (0, 0, 0), **wkw),    # out_proj weight (per head)
        pl.BlockSpec((1, C), lambda n: (0, 0), **wkw),           # out_proj bias
        pl.BlockSpec((C, C), lambda n: (0, 0), **wkw),           # fused fc1/fc2 weight
    ]
    out_spec = pl.BlockSpec((1, L, C), lambda n: (n, 0, 0))
    return in_specs, out_spec


def transformer_layer(x, params, num_heads, compute_dtype=jnp.bfloat16):
    """x: (L, N, C) in the PyTorch (seq, batch, embed) layout of the module."""
    L, N, C = x.shape
    assert C % num_heads == 0, (C, num_heads)
    dh = C // num_heads
    scale = 1.0 / math.sqrt(dh)
    f32 = jnp.float32

    # --- offline weight folding (f32), MXU operands cast to bf16 once here ---
    wiq, wik, wiv = jnp.split(params["in_proj_w"].astype(f32), 3, axis=0)
    biq, bik, biv = jnp.split(params["in_proj_b"].astype(f32), 3, axis=0)
    wq_f = (params["wq"].astype(f32).T @ wiq.T) * scale
    wk_f = params["wk"].astype(f32).T @ wik.T
    wv_f = params["wv"].astype(f32).T @ wiv.T
    wqkv = jnp.stack([wq_f, wk_f, wv_f]).astype(compute_dtype)            # (3,C,C)
    bqkv = jnp.stack([biq * scale, bik, biv])[:, None, :].astype(f32)     # (3,1,C)
    wo_heads = params["out_proj_w"].astype(f32).T.reshape(
        num_heads, dh, C).astype(compute_dtype)                           # (H,dh,C)
    bo = params["out_proj_b"].astype(f32)[None, :]                        # (1,C)
    wff = (params["w1"].astype(f32).T @ params["w2"].astype(f32).T
           ).astype(compute_dtype)                                        # (C,C)

    # Batch-major so each grid step owns a lane-dense (L, C) token block.
    xb = jnp.transpose(x, (1, 0, 2))                                      # (N,L,C)

    cdt_size = jnp.dtype(compute_dtype).itemsize
    xsize = jnp.dtype(x.dtype).itemsize
    flops = N * (2 * L * C * C * 5 + 4 * num_heads * L * L * dh)
    bytes_accessed = 2 * N * L * C * xsize + 5 * C * C * cdt_size + 5 * C * 4
    cost = pl.CostEstimate(flops=flops,
                           transcendentals=N * num_heads * L * L,
                           bytes_accessed=bytes_accessed)

    # Explicit VMEM budget: weights + double-buffered x blocks + f32 intermediates
    # (q/k/v, per-head scores, head outputs), 2x headroom, clamped to chip-safe range.
    interm = (6 * L * C + 2 * num_heads * L * L + 2 * num_heads * L * C) * 4
    vmem_budget = 5 * C * C * cdt_size + 4 * L * C * xsize + interm
    vmem_limit = int(min(max(2 * vmem_budget, 16 << 20), 64 << 20))

    kernel = functools.partial(_transformer_layer_kernel, num_heads=num_heads)

    def run(single_buffer_weights):
        in_specs, out_spec = _build_specs(L, C, num_heads, dh, single_buffer_weights)
        return pl.pallas_call(
            kernel,
            out_shape=jax.ShapeDtypeStruct((N, L, C), x.dtype),
            grid_spec=pltpu.PrefetchScalarGridSpec(
                num_scalar_prefetch=0,
                grid=(N,),
                in_specs=in_specs,
                out_specs=out_spec,
            ),
            compiler_params=pltpu.CompilerParams(
                dimension_semantics=("parallel",),
                vmem_limit_bytes=vmem_limit,
            ),
            cost_estimate=cost,
        )(xb, wqkv, bqkv, wo_heads, bo, wff)

    try:
        # Preferred: constant-index weight inputs single-buffered (halves weight VMEM).
        out = jax.block_until_ready(run(single_buffer_weights=True))
    except Exception:
        # Fallback if pl.Buffered(1) is unsupported on this jax/libtpu combo.
        out = run(single_buffer_weights=False)

    return jnp.transpose(out, (1, 0, 2))                                  # (L,N,C)


class TransformerLayer:
    """JAX/Pallas port of the PyTorch TransformerLayer module."""

    def __init__(self, params, num_heads):
        self.params = params
        self.num_heads = num_heads

    def __call__(self, x):
        return transformer_layer(x, self.params, self.num_heads)


def _reference_forward(x, params, num_heads):
    """Pure-JAX f32 reference matching the PyTorch module's math."""
    L, N, C = x.shape
    dh = C // num_heads
    scale = 1.0 / math.sqrt(dh)

    q = x @ params["wq"].T
    k = x @ params["wk"].T
    v = x @ params["wv"].T

    wiq, wik, wiv = jnp.split(params["in_proj_w"], 3, axis=0)
    biq, bik, biv = jnp.split(params["in_proj_b"], 3, axis=0)
    q = q @ wiq.T + biq
    k = k @ wik.T + bik
    v = v @ wiv.T + biv

    def heads(t):  # (L, N, C) -> (N, H, L, dh)
        return t.reshape(L, N, num_heads, dh).transpose(1, 2, 0, 3)

    qh, kh, vh = heads(q), heads(k), heads(v)
    s = jnp.einsum("nhld,nhmd->nhlm", qh, kh) * scale
    p = jax.nn.softmax(s, axis=-1)
    o = jnp.einsum("nhlm,nhmd->nhld", p, vh)               # (N, H, L, dh)
    o = o.transpose(2, 0, 1, 3).reshape(L, N, C)
    attn_out = o @ params["out_proj_w"].T + params["out_proj_b"]

    x1 = attn_out + x
    y = (x1 @ params["w1"].T) @ params["w2"].T
    return y + x1


if __name__ == "__main__":
    key = jax.random.PRNGKey(0)
    kx, *kw = jax.random.split(key, 10)

    L, N, C, H = 8, 2, 32, 4  # seq=8, batch=2, hidden=32, 4 heads
    x = jax.random.normal(kx, (L, N, C), dtype=jnp.float32)

    def w(k, shape, scale=0.1):
        return scale * jax.random.normal(k, shape, dtype=jnp.float32)

    params = dict(
        wq=w(kw[0], (C, C)), wk=w(kw[1], (C, C)), wv=w(kw[2], (C, C)),
        in_proj_w=w(kw[3], (3 * C, C)), in_proj_b=w(kw[4], (3 * C,)),
        out_proj_w=w(kw[5], (C, C)), out_proj_b=w(kw[6], (C,)),
        w1=w(kw[7], (C, C)), w2=w(kw[8], (C, C)),
    )

    layer = TransformerLayer(params, num_heads=H)
    out = jax.block_until_ready(layer(x))

    ref = _reference_forward(x, params, num_heads=H)
    assert out.shape == (L, N, C), out.shape
    err = float(jnp.max(jnp.abs(out - ref)))
    # bf16 MXU operands (f32 accumulation) vs an all-f32 reference: loose tolerance.
    assert jnp.allclose(out, ref, atol=3e-2, rtol=3e-2), err

    print("KERNEL_OK")
</pallas_src>

<mosaic_0001>
module attributes {stable_mosaic.version = 11 : i64} {
  func.func @_transformer_layer_kernel(%arg0: i32, %arg1: memref<1x8x32xf32, #tpu.memory_space<vmem>>, %arg2: memref<3x32x32xbf16, #tpu.memory_space<vmem>>, %arg3: memref<3x1x32xf32, #tpu.memory_space<vmem>>, %arg4: memref<4x8x32xbf16, #tpu.memory_space<vmem>>, %arg5: memref<1x32xf32, #tpu.memory_space<vmem>>, %arg6: memref<32x32xbf16, #tpu.memory_space<vmem>>, %arg7: memref<1x8x32xf32, #tpu.memory_space<vmem>>) attributes {dimension_semantics = [#tpu.dimension_semantics<parallel>], iteration_bounds = array<i64: 2>, scalar_prefetch = 0 : i64, scratch_operands = 0 : i64, tpu.core_type = #tpu.core_type<tc>, window_params = [{transform_indices = @transform_0, window_bounds = array<i64: 1, 8, 32>}, {pipeline_mode = #tpu.pipeline_mode<synchronous>, transform_indices = @transform_1, window_bounds = array<i64: 3, 32, 32>}, {pipeline_mode = #tpu.pipeline_mode<synchronous>, transform_indices = @transform_2, window_bounds = array<i64: 3, 1, 32>}, {pipeline_mode = #tpu.pipeline_mode<synchronous>, transform_indices = @transform_3, window_bounds = array<i64: 4, 8, 32>}, {pipeline_mode = #tpu.pipeline_mode<synchronous>, transform_indices = @transform_4, window_bounds = array<i64: 1, 32>}, {pipeline_mode = #tpu.pipeline_mode<synchronous>, transform_indices = @transform_5, window_bounds = array<i64: 32, 32>}, {transform_indices = @transform_6, window_bounds = array<i64: 1, 8, 32>}]} {
    %c0 = arith.constant 0 : index
    %c0_0 = arith.constant 0 : index
    %c0_1 = arith.constant 0 : index
    %0 = vector.load %arg1[%c0, %c0_0, %c0_1] : memref<1x8x32xf32, #tpu.memory_space<vmem>>, vector<1x8x32xf32>
    %1 = vector.shape_cast %0 : vector<1x8x32xf32> to vector<8x32xf32>
    %2 = arith.truncf %1 : vector<8x32xf32> to vector<8x32xbf16>
    %c0_2 = arith.constant 0 : index
    %c0_3 = arith.constant 0 : index
    %c0_4 = arith.constant 0 : index
    %3 = vector.load %arg2[%c0_2, %c0_3, %c0_4] : memref<3x32x32xbf16, #tpu.memory_space<vmem>>, vector<1x32x32xbf16>
    %4 = vector.shape_cast %3 : vector<1x32x32xbf16> to vector<32x32xbf16>
    %cst = arith.constant dense<0.000000e+00> : vector<8x32xf32>
    %5 = tpu.matmul %2, %4, %cst {dimension_numbers = #tpu.dot_dimension_numbers<[1], [0], [0], [1], [0, 0, 1, 1], [], []>} : vector<8x32xbf16>, vector<32x32xbf16>, vector<8x32xf32> -> vector<8x32xf32>
    %c0_5 = arith.constant 0 : index
    %c0_6 = arith.constant 0 : index
    %c0_7 = arith.constant 0 : index
    %6 = vector.load %arg3[%c0_5, %c0_6, %c0_7] : memref<3x1x32xf32, #tpu.memory_space<vmem>>, vector<1x1x32xf32>
    %7 = vector.shape_cast %6 : vector<1x1x32xf32> to vector<1x32xf32>
    %8 = vector.broadcast %7 : vector<1x32xf32> to vector<8x32xf32>
    %9 = arith.addf %5, %8 : vector<8x32xf32>
    %10 = arith.truncf %9 : vector<8x32xf32> to vector<8x32xbf16>
    %11 = vector.shape_cast %10 : vector<8x32xbf16> to vector<8x4x8xbf16>
    %12 = tpu.transpose %11, [1, 0, 2] : vector<8x4x8xbf16> -> vector<4x8x8xbf16>
    %c1 = arith.constant 1 : index
    %c0_8 = arith.constant 0 : index
    %c0_9 = arith.constant 0 : index
    %13 = vector.load %arg2[%c1, %c0_8, %c0_9] : memref<3x32x32xbf16, #tpu.memory_space<vmem>>, vector<1x32x32xbf16>
    %14 = vector.shape_cast %13 : vector<1x32x32xbf16> to vector<32x32xbf16>
    %cst_10 = arith.constant dense<0.000000e+00> : vector<8x32xf32>
    %15 = tpu.matmul %2, %14, %cst_10 {dimension_numbers = #tpu.dot_dimension_numbers<[1], [0], [0], [1], [0, 0, 1, 1], [], []>} : vector<8x32xbf16>, vector<32x32xbf16>, vector<8x32xf32> -> vector<8x32xf32>
    %c1_11 = arith.constant 1 : index
    %c0_12 = arith.constant 0 : index
    %c0_13 = arith.constant 0 : index
    %16 = vector.load %arg3[%c1_11, %c0_12, %c0_13] : memref<3x1x32xf32, #tpu.memory_space<vmem>>, vector<1x1x32xf32>
    %17 = vector.shape_cast %16 : vector<1x1x32xf32> to vector<1x32xf32>
    %18 = vector.broadcast %17 : vector<1x32xf32> to vector<8x32xf32>
    %19 = arith.addf %15, %18 : vector<8x32xf32>
    %20 = arith.truncf %19 : vector<8x32xf32> to vector<8x32xbf16>
    %21 = vector.shape_cast %20 : vector<8x32xbf16> to vector<8x4x8xbf16>
    %22 = tpu.transpose %21, [1, 0, 2] : vector<8x4x8xbf16> -> vector<4x8x8xbf16>
    %c2 = arith.constant 2 : index
    %c0_14 = arith.constant 0 : index
    %c0_15 = arith.constant 0 : index
    %23 = vector.load %arg2[%c2, %c0_14, %c0_15] : memref<3x32x32xbf16, #tpu.memory_space<vmem>>, vector<1x32x32xbf16>
    %24 = vector.shape_cast %23 : vector<1x32x32xbf16> to vector<32x32xbf16>
    %cst_16 = arith.constant dense<0.000000e+00> : vector<8x32xf32>
    %25 = tpu.matmul %2, %24, %cst_16 {dimension_numbers = #tpu.dot_dimension_numbers<[1], [0], [0], [1], [0, 0, 1, 1], [], []>} : vector<8x32xbf16>, vector<32x32xbf16>, vector<8x32xf32> -> vector<8x32xf32>
    %c2_17 = arith.constant 2 : index
    %c0_18 = arith.constant 0 : index
    %c0_19 = arith.constant 0 : index
    %26 = vector.load %arg3[%c2_17, %c0_18, %c0_19] : memref<3x1x32xf32, #tpu.memory_space<vmem>>, vector<1x1x32xf32>
    %27 = vector.shape_cast %26 : vector<1x1x32xf32> to vector<1x32xf32>
    %28 = vector.broadcast %27 : vector<1x32xf32> to vector<8x32xf32>
    %29 = arith.addf %25, %28 : vector<8x32xf32>
    %30 = arith.truncf %29 : vector<8x32xf32> to vector<8x32xbf16>
    %31 = vector.shape_cast %30 : vector<8x32xbf16> to vector<8x4x8xbf16>
    %32 = tpu.transpose %31, [1, 0, 2] : vector<8x4x8xbf16> -> vector<4x8x8xbf16>
    "tpu.trace_start"() <{level = 10 : i32, message = "hqd,hkd->hqk"}> : () -> ()
    %cst_20 = arith.constant dense<0.000000e+00> : vector<4x8x8xf32>
    %33 = tpu.matmul %12, %22, %cst_20 {dimension_numbers = #tpu.dot_dimension_numbers<[2], [2], [1], [1], [0, 0, 0, 1, 1, 1], [0], [0]>} : vector<4x8x8xbf16>, vector<4x8x8xbf16>, vector<4x8x8xf32> -> vector<4x8x8xf32>
    "tpu.trace_stop"() : () -> ()
    %cst_21 = arith.constant dense<0xFF800000> : vector<4x8xf32>
    %34 = vector.multi_reduction <maximumf>, %33, %cst_21 [2] : vector<4x8x8xf32> to vector<4x8xf32>
    %35 = vector.shape_cast %34 : vector<4x8xf32> to vector<4x8x1xf32>
    %36 = vector.broadcast %35 : vector<4x8x1xf32> to vector<4x8x8xf32>
    %37 = arith.subf %33, %36 : vector<4x8x8xf32>
    %38 = math.exp %37 : vector<4x8x8xf32>
    %cst_22 = arith.constant dense<0.000000e+00> : vector<4x8xf32>
    %39 = vector.multi_reduction <add>, %38, %cst_22 [2] : vector<4x8x8xf32> to vector<4x8xf32>
    %40 = vector.shape_cast %39 : vector<4x8xf32> to vector<4x8x1xf32>
    %41 = tpu.reciprocal %40 {approx = true} : vector<4x8x1xf32> -> vector<4x8x1xf32>
    %42 = arith.truncf %38 : vector<4x8x8xf32> to vector<4x8x8xbf16>
    "tpu.trace_start"() <{level = 10 : i32, message = "hqk,hkd->hqd"}> : () -> ()
    %cst_23 = arith.constant dense<0.000000e+00> : vector<4x8x8xf32>
    %43 = tpu.matmul %42, %32, %cst_23 {dimension_numbers = #tpu.dot_dimension_numbers<[2], [1], [1], [2], [0, 0, 0, 1, 1, 2], [0], [0]>} : vector<4x8x8xbf16>, vector<4x8x8xbf16>, vector<4x8x8xf32> -> vector<4x8x8xf32>
    "tpu.trace_stop"() : () -> ()
    %44 = vector.broadcast %41 : vector<4x8x1xf32> to vector<4x8x8xf32>
    %45 = arith.mulf %43, %44 : vector<4x8x8xf32>
    %46 = arith.truncf %45 : vector<4x8x8xf32> to vector<4x8x8xbf16>
    %c0_24 = arith.constant 0 : index
    %c0_25 = arith.constant 0 : index
    %c0_26 = arith.constant 0 : index
    %47 = vector.load %arg4[%c0_24, %c0_25, %c0_26] : memref<4x8x32xbf16, #tpu.memory_space<vmem>>, vector<4x8x32xbf16>
    "tpu.trace_start"() <{level = 10 : i32, message = "hqd,hdc->hqc"}> : () -> ()
    %cst_27 = arith.constant dense<0.000000e+00> : vector<4x8x32xf32>
    %48 = tpu.matmul %46, %47, %cst_27 {dimension_numbers = #tpu.dot_dimension_numbers<[2], [1], [1], [2], [0, 0, 0, 1, 1, 2], [0], [0]>} : vector<4x8x8xbf16>, vector<4x8x32xbf16>, vector<4x8x32xf32> -> vector<4x8x32xf32>
    "tpu.trace_stop"() : () -> ()
    %cst_28 = arith.constant dense<0.000000e+00> : vector<8x32xf32>
    %49 = vector.multi_reduction <add>, %48, %cst_28 [0] : vector<4x8x32xf32> to vector<8x32xf32>
    %c0_29 = arith.constant 0 : index
    %c0_30 = arith.constant 0 : index
    %50 = vector.load %arg5[%c0_29, %c0_30] : memref<1x32xf32, #tpu.memory_space<vmem>>, vector<1x32xf32>
    %51 = vector.broadcast %50 : vector<1x32xf32> to vector<8x32xf32>
    %52 = arith.addf %49, %51 : vector<8x32xf32>
    %53 = arith.addf %52, %1 : vector<8x32xf32>
    %54 = arith.truncf %53 : vector<8x32xf32> to vector<8x32xbf16>
    %c0_31 = arith.constant 0 : index
    %c0_32 = arith.constant 0 : index
    %55 = vector.load %arg6[%c0_31, %c0_32] : memref<32x32xbf16, #tpu.memory_space<vmem>>, vector<32x32xbf16>
    %cst_33 = arith.constant dense<0.000000e+00> : vector<8x32xf32>
    %56 = tpu.matmul %54, %55, %cst_33 {dimension_numbers = #tpu.dot_dimension_numbers<[1], [0], [0], [1], [0, 0, 1, 1], [], []>} : vector<8x32xbf16>, vector<32x32xbf16>, vector<8x32xf32> -> vector<8x32xf32>
    %57 = arith.addf %56, %53 : vector<8x32xf32>
    %c0_34 = arith.constant 0 : index
    %c0_35 = arith.constant 0 : index
    %c0_36 = arith.constant 0 : index
    %58 = vector.load %arg7[%c0_34, %c0_35, %c0_36] : memref<1x8x32xf32, #tpu.memory_space<vmem>>, vector<1x8x32xf32>
    %59 = vector.shape_cast %58 : vector<1x8x32xf32> to vector<8x32xf32>
    %60 = vector.shape_cast %57 : vector<8x32xf32> to vector<1x8x32xf32>
    tpu.vector_store %arg7[%c0_34, %c0_35, %c0_36], %60 {strides = array<i32>} : memref<1x8x32xf32, #tpu.memory_space<vmem>>, vector<1x8x32xf32>,
    return
  }
  func.func @transform_0(%arg0: i32) -> (i32, i32, i32) {
    %c0_i32 = arith.constant 0 : i32
    %c0_i32_0 = arith.constant 0 : i32
    %c0_i32_1 = arith.constant 0 : i32
    return %arg0, %c0_i32, %c0_i32_0 : i32, i32, i32
  }
  func.func @transform_1(%arg0: i32) -> (i32, i32, i32) {
    %c0_i32 = arith.constant 0 : i32
    %c0_i32_0 = arith.constant 0 : i32
    %c0_i32_1 = arith.constant 0 : i32
    %c0_i32_2 = arith.constant 0 : i32
    return %c0_i32, %c0_i32_0, %c0_i32_1 : i32, i32, i32
  }
  func.func @transform_2(%arg0: i32) -> (i32, i32, i32) {
    %c0_i32 = arith.constant 0 : i32
    %c0_i32_0 = arith.constant 0 : i32
    %c0_i32_1 = arith.constant 0 : i32
    %c0_i32_2 = arith.constant 0 : i32
    return %c0_i32, %c0_i32_0, %c0_i32_1 : i32, i32, i32
  }
  func.func @transform_3(%arg0: i32) -> (i32, i32, i32) {
    %c0_i32 = arith.constant 0 : i32
    %c0_i32_0 = arith.constant 0 : i32
    %c0_i32_1 = arith.constant 0 : i32
    %c0_i32_2 = arith.constant 0 : i32
    return %c0_i32, %c0_i32_0, %c0_i32_1 : i32, i32, i32
  }
  func.func @transform_4(%arg0: i32) -> (i32, i32) {
    %c0_i32 = arith.constant 0 : i32
    %c0_i32_0 = arith.constant 0 : i32
    %c0_i32_1 = arith.constant 0 : i32
    return %c0_i32, %c0_i32_0 : i32, i32
  }
  func.func @transform_5(%arg0: i32) -> (i32, i32) {
    %c0_i32 = arith.constant 0 : i32
    %c0_i32_0 = arith.constant 0 : i32
    %c0_i32_1 = arith.constant 0 : i32
    return %c0_i32, %c0_i32_0 : i32, i32
  }
  func.func @transform_6(%arg0: i32) -> (i32, i32, i32) {
    %c0_i32 = arith.constant 0 : i32
    %c0_i32_0 = arith.constant 0 : i32
    %c0_i32_1 = arith.constant 0 : i32
    return %arg0, %c0_i32, %c0_i32_0 : i32, i32, i32
  }
}

module attributes {stable_mosaic.version = 11 : i64} {
  func.func @_transformer_layer_kernel(%arg0: i32, %arg1: memref<1x8x32xf32, #tpu.memory_space<vmem>>, %arg2: memref<3x32x32xbf16, #tpu.memory_space<vmem>>, %arg3: memref<3x1x32xf32, #tpu.memory_space<vmem>>, %arg4: memref<4x8x32xbf16, #tpu.memory_space<vmem>>, %arg5: memref<1x32xf32, #tpu.memory_space<vmem>>, %arg6: memref<32x32xbf16, #tpu.memory_space<vmem>>, %arg7: memref<1x8x32xf32, #tpu.memory_space<vmem>>) attributes {dimension_semantics = [#tpu.dimension_semantics<parallel>], iteration_bounds = array<i64: 2>, scalar_prefetch = 0 : i64, scratch_operands = 0 : i64, tpu.core_type = #tpu.core_type<tc>, window_params = [{transform_indices = @transform_0, window_bounds = array<i64: 1, 8, 32>}, {pipeline_mode = #tpu.pipeline_mode<synchronous>, transform_indices = @transform_1, window_bounds = array<i64: 3, 32, 32>}, {pipeline_mode = #tpu.pipeline_mode<synchronous>, transform_indices = @transform_2, window_bounds = array<i64: 3, 1, 32>}, {pipeline_mode = #tpu.pipeline_mode<synchronous>, transform_indices = @transform_3, window_bounds = array<i64: 4, 8, 32>}, {pipeline_mode = #tpu.pipeline_mode<synchronous>, transform_indices = @transform_4, window_bounds = array<i64: 1, 32>}, {pipeline_mode = #tpu.pipeline_mode<synchronous>, transform_indices = @transform_5, window_bounds = array<i64: 32, 32>}, {transform_indices = @transform_6, window_bounds = array<i64: 1, 8, 32>}]} {
    %c0 = arith.constant 0 : index
    %c0_0 = arith.constant 0 : index
    %c0_1 = arith.constant 0 : index
    %0 = vector.load %arg1[%c0, %c0_0, %c0_1] : memref<1x8x32xf32, #tpu.memory_space<vmem>>, vector<1x8x32xf32>
    %1 = vector.shape_cast %0 : vector<1x8x32xf32> to vector<8x32xf32>
    %2 = arith.truncf %1 : vector<8x32xf32> to vector<8x32xbf16>
    %c0_2 = arith.constant 0 : index
    %c0_3 = arith.constant 0 : index
    %c0_4 = arith.constant 0 : index
    %3 = vector.load %arg2[%c0_2, %c0_3, %c0_4] : memref<3x32x32xbf16, #tpu.memory_space<vmem>>, vector<1x32x32xbf16>
    %4 = vector.shape_cast %3 : vector<1x32x32xbf16> to vector<32x32xbf16>
    %cst = arith.constant dense<0.000000e+00> : vector<8x32xf32>
    %5 = tpu.matmul %2, %4, %cst {dimension_numbers = #tpu.dot_dimension_numbers<[1], [0], [0], [1], [0, 0, 1, 1], [], []>} : vector<8x32xbf16>, vector<32x32xbf16>, vector<8x32xf32> -> vector<8x32xf32>
    %c0_5 = arith.constant 0 : index
    %c0_6 = arith.constant 0 : index
    %c0_7 = arith.constant 0 : index
    %6 = vector.load %arg3[%c0_5, %c0_6, %c0_7] : memref<3x1x32xf32, #tpu.memory_space<vmem>>, vector<1x1x32xf32>
    %7 = vector.shape_cast %6 : vector<1x1x32xf32> to vector<1x32xf32>
    %8 = vector.broadcast %7 : vector<1x32xf32> to vector<8x32xf32>
    %9 = arith.addf %5, %8 : vector<8x32xf32>
    %10 = arith.truncf %9 : vector<8x32xf32> to vector<8x32xbf16>
    %11 = vector.shape_cast %10 : vector<8x32xbf16> to vector<8x4x8xbf16>
    %12 = tpu.transpose %11, [1, 0, 2] : vector<8x4x8xbf16> -> vector<4x8x8xbf16>
    %c1 = arith.constant 1 : index
    %c0_8 = arith.constant 0 : index
    %c0_9 = arith.constant 0 : index
    %13 = vector.load %arg2[%c1, %c0_8, %c0_9] : memref<3x32x32xbf16, #tpu.memory_space<vmem>>, vector<1x32x32xbf16>
    %14 = vector.shape_cast %13 : vector<1x32x32xbf16> to vector<32x32xbf16>
    %cst_10 = arith.constant dense<0.000000e+00> : vector<8x32xf32>
    %15 = tpu.matmul %2, %14, %cst_10 {dimension_numbers = #tpu.dot_dimension_numbers<[1], [0], [0], [1], [0, 0, 1, 1], [], []>} : vector<8x32xbf16>, vector<32x32xbf16>, vector<8x32xf32> -> vector<8x32xf32>
    %c1_11 = arith.constant 1 : index
    %c0_12 = arith.constant 0 : index
    %c0_13 = arith.constant 0 : index
    %16 = vector.load %arg3[%c1_11, %c0_12, %c0_13] : memref<3x1x32xf32, #tpu.memory_space<vmem>>, vector<1x1x32xf32>
    %17 = vector.shape_cast %16 : vector<1x1x32xf32> to vector<1x32xf32>
    %18 = vector.broadcast %17 : vector<1x32xf32> to vector<8x32xf32>
    %19 = arith.addf %15, %18 : vector<8x32xf32>
    %20 = arith.truncf %19 : vector<8x32xf32> to vector<8x32xbf16>
    %21 = vector.shape_cast %20 : vector<8x32xbf16> to vector<8x4x8xbf16>
    %22 = tpu.transpose %21, [1, 0, 2] : vector<8x4x8xbf16> -> vector<4x8x8xbf16>
    %c2 = arith.constant 2 : index
    %c0_14 = arith.constant 0 : index
    %c0_15 = arith.constant 0 : index
    %23 = vector.load %arg2[%c2, %c0_14, %c0_15] : memref<3x32x32xbf16, #tpu.memory_space<vmem>>, vector<1x32x32xbf16>
    %24 = vector.shape_cast %23 : vector<1x32x32xbf16> to vector<32x32xbf16>
    %cst_16 = arith.constant dense<0.000000e+00> : vector<8x32xf32>
    %25 = tpu.matmul %2, %24, %cst_16 {dimension_numbers = #tpu.dot_dimension_numbers<[1], [0], [0], [1], [0, 0, 1, 1], [], []>} : vector<8x32xbf16>, vector<32x32xbf16>, vector<8x32xf32> -> vector<8x32xf32>
    %c2_17 = arith.constant 2 : index
    %c0_18 = arith.constant 0 : index
    %c0_19 = arith.constant 0 : index
    %26 = vector.load %arg3[%c2_17, %c0_18, %c0_19] : memref<3x1x32xf32, #tpu.memory_space<vmem>>, vector<1x1x32xf32>
    %27 = vector.shape_cast %26 : vector<1x1x32xf32> to vector<1x32xf32>
    %28 = vector.broadcast %27 : vector<1x32xf32> to vector<8x32xf32>
    %29 = arith.addf %25, %28 : vector<8x32xf32>
    %30 = arith.truncf %29 : vector<8x32xf32> to vector<8x32xbf16>
    %31 = vector.shape_cast %30 : vector<8x32xbf16> to vector<8x4x8xbf16>
    %32 = tpu.transpose %31, [1, 0, 2] : vector<8x4x8xbf16> -> vector<4x8x8xbf16>
    "tpu.trace_start"() <{level = 10 : i32, message = "hqd,hkd->hqk"}> : () -> ()
    %cst_20 = arith.constant dense<0.000000e+00> : vector<4x8x8xf32>
    %33 = tpu.matmul %12, %22, %cst_20 {dimension_numbers = #tpu.dot_dimension_numbers<[2], [2], [1], [1], [0, 0, 0, 1, 1, 1], [0], [0]>} : vector<4x8x8xbf16>, vector<4x8x8xbf16>, vector<4x8x8xf32> -> vector<4x8x8xf32>
    "tpu.trace_stop"() : () -> ()
    %cst_21 = arith.constant dense<0xFF800000> : vector<4x8xf32>
    %34 = vector.multi_reduction <maximumf>, %33, %cst_21 [2] : vector<4x8x8xf32> to vector<4x8xf32>
    %35 = vector.shape_cast %34 : vector<4x8xf32> to vector<4x8x1xf32>
    %36 = vector.broadcast %35 : vector<4x8x1xf32> to vector<4x8x8xf32>
    %37 = arith.subf %33, %36 : vector<4x8x8xf32>
    %38 = math.exp %37 : vector<4x8x8xf32>
    %cst_22 = arith.constant dense<0.000000e+00> : vector<4x8xf32>
    %39 = vector.multi_reduction <add>, %38, %cst_22 [2] : vector<4x8x8xf32> to vector<4x8xf32>
    %40 = vector.shape_cast %39 : vector<4x8xf32> to vector<4x8x1xf32>
    %41 = tpu.reciprocal %40 {approx = true} : vector<4x8x1xf32> -> vector<4x8x1xf32>
    %42 = arith.truncf %38 : vector<4x8x8xf32> to vector<4x8x8xbf16>
    "tpu.trace_start"() <{level = 10 : i32, message = "hqk,hkd->hqd"}> : () -> ()
    %cst_23 = arith.constant dense<0.000000e+00> : vector<4x8x8xf32>
    %43 = tpu.matmul %42, %32, %cst_23 {dimension_numbers = #tpu.dot_dimension_numbers<[2], [1], [1], [2], [0, 0, 0, 1, 1, 2], [0], [0]>} : vector<4x8x8xbf16>, vector<4x8x8xbf16>, vector<4x8x8xf32> -> vector<4x8x8xf32>
    "tpu.trace_stop"() : () -> ()
    %44 = vector.broadcast %41 : vector<4x8x1xf32> to vector<4x8x8xf32>
    %45 = arith.mulf %43, %44 : vector<4x8x8xf32>
    %46 = arith.truncf %45 : vector<4x8x8xf32> to vector<4x8x8xbf16>
    %c0_24 = arith.constant 0 : index
    %c0_25 = arith.constant 0 : index
    %c0_26 = arith.constant 0 : index
    %47 = vector.load %arg4[%c0_24, %c0_25, %c0_26] : memref<4x8x32xbf16, #tpu.memory_space<vmem>>, vector<4x8x32xbf16>
    "tpu.trace_start"() <{level = 10 : i32, message = "hqd,hdc->hqc"}> : () -> ()
    %cst_27 = arith.constant dense<0.000000e+00> : vector<4x8x32xf32>
    %48 = tpu.matmul %46, %47, %cst_27 {dimension_numbers = #tpu.dot_dimension_numbers<[2], [1], [1], [2], [0, 0, 0, 1, 1, 2], [0], [0]>} : vector<4x8x8xbf16>, vector<4x8x32xbf16>, vector<4x8x32xf32> -> vector<4x8x32xf32>
    "tpu.trace_stop"() : () -> ()
    %cst_28 = arith.constant dense<0.000000e+00> : vector<8x32xf32>
    %49 = vector.multi_reduction <add>, %48, %cst_28 [0] : vector<4x8x32xf32> to vector<8x32xf32>
    %c0_29 = arith.constant 0 : index
    %c0_30 = arith.constant 0 : index
    %50 = vector.load %arg5[%c0_29, %c0_30] : memref<1x32xf32, #tpu.memory_space<vmem>>, vector<1x32xf32>
    %51 = vector.broadcast %50 : vector<1x32xf32> to vector<8x32xf32>
    %52 = arith.addf %49, %51 : vector<8x32xf32>
    %53 = arith.addf %52, %1 : vector<8x32xf32>
    %54 = arith.truncf %53 : vector<8x32xf32> to vector<8x32xbf16>
    %c0_31 = arith.constant 0 : index
    %c0_32 = arith.constant 0 : index
    %55 = vector.load %arg6[%c0_31, %c0_32] : memref<32x32xbf16, #tpu.memory_space<vmem>>, vector<32x32xbf16>
    %cst_33 = arith.constant dense<0.000000e+00> : vector<8x32xf32>
    %56 = tpu.matmul %54, %55, %cst_33 {dimension_numbers = #tpu.dot_dimension_numbers<[1], [0], [0], [1], [0, 0, 1, 1], [], []>} : vector<8x32xbf16>, vector<32x32xbf16>, vector<8x32xf32> -> vector<8x32xf32>
    %57 = arith.addf %56, %53 : vector<8x32xf32>
    %c0_34 = arith.constant 0 : index
    %c0_35 = arith.constant 0 : index
    %c0_36 = arith.constant 0 : index
    %58 = vector.load %arg7[%c0_34, %c0_35, %c0_36] : memref<1x8x32xf32, #tpu.memory_space<vmem>>, vector<1x8x32xf32>
    %59 = vector.shape_cast %58 : vector<1x8x32xf32> to vector<8x32xf32>
    %60 = vector.shape_cast %57 : vector<8x32xf32> to vector<1x8x32xf32>
    tpu.vector_store %arg7[%c0_34, %c0_35, %c0_36], %60 {strides = array<i32>} : memref<1x8x32xf32, #tpu.memory_space<vmem>>, vector<1x8x32xf32>,
    return
  }
  func.func @transform_0(%arg0: i32) -> (i32, i32, i32) {
    %c0_i32 = arith.constant 0 : i32
    %c0_i32_0 = arith.constant 0 : i32
    %c0_i32_1 = arith.constant 0 : i32
    return %arg0, %c0_i32, %c0_i32_0 : i32, i32, i32
  }
  func.func @transform_1(%arg0: i32) -> (i32, i32, i32) {
    %c0_i32 = arith.constant 0 : i32
    %c0_i32_0 = arith.constant 0 : i32
    %c0_i32_1 = arith.constant 0 : i32
    %c0_i32_2 = arith.constant 0 : i32
    return %c0_i32, %c0_i32_0, %c0_i32_1 : i32, i32, i32
  }
  func.func @transform_2(%arg0: i32) -> (i32, i32, i32) {
    %c0_i32 = arith.constant 0 : i32
    %c0_i32_0 = arith.constant 0 : i32
    %c0_i32_1 = arith.constant 0 : i32
    %c0_i32_2 = arith.constant 0 : i32
    return %c0_i32, %c0_i32_0, %c0_i32_1 : i32, i32, i32
  }
  func.func @transform_3(%arg0: i32) -> (i32, i32, i32) {
    %c0_i32 = arith.constant 0 : i32
    %c0_i32_0 = arith.constant 0 : i32
    %c0_i32_1 = arith.constant 0 : i32
    %c0_i32_2 = arith.constant 0 : i32
    return %c0_i32, %c0_i32_0, %c0_i32_1 : i32, i32, i32
  }
  func.func @transform_4(%arg0: i32) -> (i32, i32) {
    %c0_i32 = arith.constant 0 : i32
    %c0_i32_0 = arith.constant 0 : i32
    %c0_i32_1 = arith.constant 0 : i32
    return %c0_i32, %c0_i32_0 : i32, i32
  }
  func.func @transform_5(%arg0: i32) -> (i32, i32) {
    %c0_i32 = arith.constant 0 : i32
    %c0_i32_0 = arith.constant 0 : i32
    %c0_i32_1 = arith.constant 0 : i32
    return %c0_i32, %c0_i32_0 : i32, i32
  }
  func.func @transform_6(%arg0: i32) -> (i32, i32, i32) {
    %c0_i32 = arith.constant 0 : i32
    %c0_i32_0 = arith.constant 0 : i32
    %c0_i32_1 = arith.constant 0 : i32
    return %arg0, %c0_i32, %c0_i32_0 : i32, i32, i32
  }
}

</mosaic_0001>

<llo_original>
// kernel: tpu_custom_call.1
$region0: #{tpu_custom_call.1}
  #allocation0 [shape = 'u32[]', space=smem, size = 0x4, offset = 0x4, fixed_abs, tag = 'smem constant byte address 0x4 - core index']
  #allocation1 [shape = 'u32[72,128]{1,0:T(1,128)}', space=vmem, size = 0x9000, scoped, tag = 'internal scratch']
  %s0 = inlined_call_operand.hbm [shape: f32[2,8,32], index: 0, kind: input, shape index: {}]
  %s1 = inlined_call_operand.hbm [shape: bf16[3,32,32], index: 1, kind: input, shape index: {}]
  %s2 = inlined_call_operand.hbm [shape: f32[3,1,32], index: 2, kind: input, shape index: {}]
  %s3 = inlined_call_operand.hbm [shape: bf16[4,8,32], index: 3, kind: input, shape index: {}]
  %s4 = inlined_call_operand.vmem [shape: f32[1,32], index: 4, kind: input, shape index: {}]
  %s5 = inlined_call_operand.hbm [shape: bf16[32,32], index: 5, kind: input, shape index: {}]
  %s6 = inlined_call_operand.hbm [shape: f32[2,8,32], index: 6, kind: output, shape index: {}]
  %s7 = sld [smem:[#allocation0]]
  $region77: #{tpu_custom_call.1} parent=0
    _
  %s9 = ssub.s32 1, %s7
  %s10 = scalar_select 0, %s9, %s7
  $region1: #{tpu_custom_call.1} parent=0
    #allocation2 [shape = 'u8[8192]{0}', space=vmem, size = 0x2000, scoped, tag = 'input window, operand 0']
    #allocation3 [shape = 's32[2]{0}', space=sflag, size = 0x8, scoped, tag = 'scoped memory for tpu_custom_call.1']
    #allocation4 [shape = 's32[2]{0}', space=sflag, size = 0x8, scoped, tag = 'scoped memory for tpu_custom_call.1']
    #allocation5 [shape = 'u8[24576]{0}', space=vmem, size = 0x6000, scoped, tag = 'input window, operand 1, single buffered']
    #allocation6 [shape = 's32[1]{0}', space=sflag, size = 0x4, scoped, tag = 'scoped memory for tpu_custom_call.1']
    #allocation7 [shape = 'u8[1536]{0}', space=vmem, size = 0x800, scoped, tag = 'input window, operand 2, single buffered']
    #allocation8 [shape = 'u8[8192]{0}', space=vmem, size = 0x2000, scoped, tag = 'input window, operand 3, single buffered']
    #allocation9 [shape = 's32[1]{0}', space=sflag, size = 0x4, scoped, tag = 'scoped memory for tpu_custom_call.1']
    #allocation10 [shape = 'u8[8192]{0}', space=vmem, size = 0x2000, scoped, tag = 'input window, operand 5, single buffered']
    #allocation11 [shape = 'u8[8192]{0}', space=vmem, size = 0x2000, scoped, tag = 'output window, operand 0']
    %11 = vsyncpa [#allocation3], 0
    %s12 = scalar_lea.sflag [#allocation3], 1
    %13 = vsyncpa %s12, 0
    %14 = vsyncpa [#allocation6], 0
    %15 = vsyncpa [#allocation9], 0
    %16 = vsyncpa [#allocation4], 0
    %s17 = scalar_lea.sflag [#allocation4], 1
    %18 = vsyncpa %s17, 0
    loop: start=0, step=1, limit=4
    $region2: #{tpu_custom_call.1} parent=1 // loop_pre_header
      _
    $region3: #{tpu_custom_call.1} parent=1 // loop_header
      %s20 = sphi 0, %s24
      %p21 = scmp.ge.s32.totalorder %s20, 4
      %s30 = sphi 0, %s32
      %s33 = sphi 0, %s30
      %s34 = sphi 0, %s33
      %s50 = sphi 0, %s34
      %s54 = sphi 0, %s54
      %s56 = sphi 0, %s54
      %s57 = sphi 0, %s56
      %s71 = sphi 0, %s57
      %s75 = sphi 0, %s75
      %s77 = sphi 0, %s75
      %s78 = sphi 0, %s77
      %s92 = sphi 0, %s78
      %s96 = sphi 0, %s96
      %s98 = sphi 0, %s96
      %s99 = sphi 0, %s98
      %s113 = sphi 0, %s99
      %s117 = sphi 0, %s117
      %s119 = sphi 0, %s117
      %s120 = sphi 0, %s119
      %s134 = sphi 0, %s120
      %s138 = sphi 0, %s138
      %s140 = sphi 0, %s138
      %s141 = sphi 0, %s140
      %s155 = sphi 0, %s141
      %s161 = sphi 0, %s163
      %s164 = sphi 0, %s161
      %s165 = sphi 0, %s164
      %s181 = sphi 0, %s165
    $region4: #{tpu_custom_call.1} parent=1 // loop_header_branch
      %23 = sbr.rel (%p21) target = $region8
    $region5: #{tpu_custom_call.1} parent=1 // loop_body
      %s25 = ssub.s32 %s20, 1
      %s26 = ssub.s32 %s20, 2
      %s27 = sadd.s32 %s20, 1
      %s28 = ssub.s32 %s20, %s27
      %p29 = scmp.eq.s32.totalorder %s28, 0
      %s31 = sadd.s32 %s30, 1
      %s32 = scalar_select %p29, %s30, %s31
      %p35 = pneg %p29
      %p36 = scmp.eq.s32.totalorder %s20, 1
      %p37 = por %p35, %p36
      %p38 = scmp.ne.s32.totalorder %s30, %s33
      %p39 = scmp.eq.s32.totalorder %s20, 0
      %p40 = por %p38, %p39
      %p41 = scmp.ne.s32.totalorder %s30, %s33
      %p42 = scmp.eq.s32.totalorder %s25, 1
      %p43 = por %p41, %p42
      %p44 = scmp.ne.s32.totalorder %s33, %s34
      %p45 = scmp.eq.s32.totalorder %s25, 0
      %p46 = por %p44, %p45
      %p47 = scmp.ne.s32.totalorder %s33, %s34
      %p48 = scmp.eq.s32.totalorder %s26, 1
      %p49 = por %p47, %p48
      %p51 = scmp.ne.s32.totalorder %s34, %s50
      %p52 = scmp.eq.s32.totalorder %s26, 0
      %p53 = por %p51, %p52
      %s55 = sadd.s32 %s54, 1
      %p58 = scmp.eq.s32.totalorder %s20, 1
      %p59 = scmp.ne.s32.totalorder %s54, %s56
      %p60 = scmp.eq.s32.totalorder %s20, 0
      %p61 = por %p59, %p60
      %p62 = scmp.ne.s32.totalorder %s54, %s56
      %p63 = scmp.eq.s32.totalorder %s25, 1
      %p64 = por %p62, %p63
      %p65 = scmp.ne.s32.totalorder %s56, %s57
      %p66 = scmp.eq.s32.totalorder %s25, 0
      %p67 = por %p65, %p66
      %p68 = scmp.ne.s32.totalorder %s56, %s57
      %p69 = scmp.eq.s32.totalorder %s26, 1
      %p70 = por %p68, %p69
      %p72 = scmp.ne.s32.totalorder %s57, %s71
      %p73 = scmp.eq.s32.totalorder %s26, 0
      %p74 = por %p72, %p73
      %s76 = sadd.s32 %s75, 1
      %p79 = scmp.eq.s32.totalorder %s20, 1
      %p80 = scmp.ne.s32.totalorder %s75, %s77
      %p81 = scmp.eq.s32.totalorder %s20, 0
      %p82 = por %p80, %p81
      %p83 = scmp.ne.s32.totalorder %s75, %s77
      %p84 = scmp.eq.s32.totalorder %s25, 1
      %p85 = por %p83, %p84
      %p86 = scmp.ne.s32.totalorder %s77, %s78
      %p87 = scmp.eq.s32.totalorder %s25, 0
      %p88 = por %p86, %p87
      %p89 = scmp.ne.s32.totalorder %s77, %s78
      %p90 = scmp.eq.s32.totalorder %s26, 1
      %p91 = por %p89, %p90
      %p93 = scmp.ne.s32.totalorder %s78, %s92
      %p94 = scmp.eq.s32.totalorder %s26, 0
      %p95 = por %p93, %p94
      %s97 = sadd.s32 %s96, 1
      %p100 = scmp.eq.s32.totalorder %s20, 1
      %p101 = scmp.ne.s32.totalorder %s96, %s98
      %p102 = scmp.eq.s32.totalorder %s20, 0
      %p103 = por %p101, %p102
      %p104 = scmp.ne.s32.totalorder %s96, %s98
      %p105 = scmp.eq.s32.totalorder %s25, 1
      %p106 = por %p104, %p105
      %p107 = scmp.ne.s32.totalorder %s98, %s99
      %p108 = scmp.eq.s32.totalorder %s25, 0
      %p109 = por %p107, %p108
      %p110 = scmp.ne.s32.totalorder %s98, %s99
      %p111 = scmp.eq.s32.totalorder %s26, 1
      %p112 = por %p110, %p111
      %p114 = scmp.ne.s32.totalorder %s99, %s113
      %p115 = scmp.eq.s32.totalorder %s26, 0
      %p116 = por %p114, %p115
      %s118 = sadd.s32 %s117, 1
      %p121 = scmp.eq.s32.totalorder %s20, 1
      %p122 = scmp.ne.s32.totalorder %s117, %s119
      %p123 = scmp.eq.s32.totalorder %s20, 0
      %p124 = por %p122, %p123
      %p125 = scmp.ne.s32.totalorder %s117, %s119
      %p126 = scmp.eq.s32.totalorder %s25, 1
      %p127 = por %p125, %p126
      %p128 = scmp.ne.s32.totalorder %s119, %s120
      %p129 = scmp.eq.s32.totalorder %s25, 0
      %p130 = por %p128, %p129
      %p131 = scmp.ne.s32.totalorder %s119, %s120
      %p132 = scmp.eq.s32.totalorder %s26, 1
      %p133 = por %p131, %p132
      %p135 = scmp.ne.s32.totalorder %s120, %s134
      %p136 = scmp.eq.s32.totalorder %s26, 0
      %p137 = por %p135, %p136
      %s139 = sadd.s32 %s138, 1
      %p142 = scmp.eq.s32.totalorder %s20, 1
      %p143 = scmp.ne.s32.totalorder %s138, %s140
      %p144 = scmp.eq.s32.totalorder %s20, 0
      %p145 = por %p143, %p144
      %p146 = scmp.ne.s32.totalorder %s138, %s140
      %p147 = scmp.eq.s32.totalorder %s25, 1
      %p148 = por %p146, %p147
      %p149 = scmp.ne.s32.totalorder %s140, %s141
      %p150 = scmp.eq.s32.totalorder %s25, 0
      %p151 = por %p149, %p150
      %p152 = scmp.ne.s32.totalorder %s140, %s141
      %p153 = scmp.eq.s32.totalorder %s26, 1
      %p154 = por %p152, %p153
      %p156 = scmp.ne.s32.totalorder %s141, %s155
      %p157 = scmp.eq.s32.totalorder %s26, 0
      %p158 = por %p156, %p157
      %s159 = ssub.s32 %s20, %s27
      %p160 = scmp.eq.s32.totalorder %s159, 0
      %s162 = sadd.s32 %s161, 1
      %s163 = scalar_select %p160, %s161, %s162
      %p166 = pneg %p160
      %p167 = scmp.eq.s32.totalorder %s20, 1
      %p168 = por %p166, %p167
      %p169 = scmp.ne.s32.totalorder %s161, %s164
      %p170 = scmp.eq.s32.totalorder %s20, 0
      %p171 = por %p169, %p170
      %p172 = scmp.ne.s32.totalorder %s161, %s164
      %p173 = scmp.eq.s32.totalorder %s25, 1
      %p174 = por %p172, %p173
      %p175 = scmp.ne.s32.totalorder %s164, %s165
      %p176 = scmp.eq.s32.totalorder %s25, 0
      %p177 = por %p175, %p176
      %p178 = scmp.ne.s32.totalorder %s164, %s165
      %p179 = scmp.eq.s32.totalorder %s26, 1
      %p180 = por %p178, %p179
      %p182 = scmp.ne.s32.totalorder %s165, %s181
      %p183 = scmp.eq.s32.totalorder %s26, 0
      %p184 = por %p182, %p183
      %p185 = scmp.le.s32.totalorder 1, %s20
      %p186 = scmp.lt.s32.totalorder %s20, 3
      %p187 = pnand %p185, %p186
      %p188 = pneg %p187
      // Predicated region
      $region9: #{tpu_custom_call.1} parent=5 // pred_check
        _
      $region10: #{tpu_custom_call.1} parent=5 // pred_check_branch
        %190 = sbr.rel (%p187) target = $region12
      $region11: #{tpu_custom_call.1} parent=5 // pred_region
        %s191 = ssub.s32 %s20, 1
        // Predicated region
        $region13: #{tpu_custom_call.1} parent=11 // pred_check
          %p192 = pneg %p67
        $region14: #{tpu_custom_call.1} parent=11 // pred_check_branch
          %194 = sbr.rel (%p192) target = $region16
        $region15: #{tpu_custom_call.1} parent=11 // pred_region
          %196 = vsyncadd [#allocation6], 0
          %s197 = sshll.u32 %s1, 4
          %s198 = int_to_ptr.hbm [resolvable:$true] %s197
          %s199 = sshll.u32 [#allocation5], 4
          %s200 = int_to_ptr.vmem [resolvable:$true] %s199
          %205 = dma.hbm_to_vmem [thread:$0]  %s198, 768, %s200, [#allocation6], 64, 64, 4
        $region16: #{tpu_custom_call.1} parent=11 // pred_fallthru
          _
        // Predicated region
        $region17: #{tpu_custom_call.1} parent=11 // pred_check
          %p206 = pneg %p88
        $region18: #{tpu_custom_call.1} parent=11 // pred_check_branch
          %208 = sbr.rel (%p206) target = $region20
        $region19: #{tpu_custom_call.1} parent=11 // pred_region
          %210 = vsyncadd [#allocation6], 0
          %s211 = sshll.u32 %s2, 4
          %s212 = int_to_ptr.hbm [resolvable:$true] %s211
          %s213 = sshll.u32 [#allocation7], 4
          %s214 = int_to_ptr.vmem [resolvable:$true] %s213
          %219 = dma.hbm_to_vmem [thread:$0]  %s212, 48, %s214, [#allocation6], 16, 16, 1
        $region20: #{tpu_custom_call.1} parent=11 // pred_fallthru
          _
        // Predicated region
        $region21: #{tpu_custom_call.1} parent=11 // pred_check
          %p220 = pneg %p109
        $region22: #{tpu_custom_call.1} parent=11 // pred_check_branch
          %222 = sbr.rel (%p220) target = $region24
        $region23: #{tpu_custom_call.1} parent=11 // pred_region
          %224 = vsyncadd [#allocation9], 0
          %s225 = sshll.u32 %s3, 4
          %s226 = int_to_ptr.hbm [resolvable:$true] %s225
          %s227 = sshll.u32 [#allocation8], 4
          %s228 = int_to_ptr.vmem [resolvable:$true] %s227
          %233 = dma.hbm_to_vmem [thread:$0]  %s226, 256, %s228, [#allocation9], 64, 64, 4
        $region24: #{tpu_custom_call.1} parent=11 // pred_fallthru
          _
        // Predicated region
        $region25: #{tpu_custom_call.1} parent=11 // pred_check
          %p234 = pneg %p130
        $region26: #{tpu_custom_call.1} parent=11 // pred_check_branch
          %236 = sbr.rel (%p234) target = $region28
        $region27: #{tpu_custom_call.1} parent=11 // pred_region
          _
        $region28: #{tpu_custom_call.1} parent=11 // pred_fallthru
          _
        // Predicated region
        $region29: #{tpu_custom_call.1} parent=11 // pred_check
          %p237 = pneg %p151
        $region30: #{tpu_custom_call.1} parent=11 // pred_check_branch
          %239 = sbr.rel (%p237) target = $region32
        $region31: #{tpu_custom_call.1} parent=11 // pred_region
          %241 = vsyncadd [#allocation9], 0
          %s242 = sshll.u32 %s5, 4
          %s243 = int_to_ptr.hbm [resolvable:$true] %s242
          %s244 = sshll.u32 [#allocation10], 4
          %s245 = int_to_ptr.vmem [resolvable:$true] %s244
          %250 = dma.hbm_to_vmem [thread:$0]  %s243, 256, %s245, [#allocation9], 64, 64, 4
        $region32: #{tpu_custom_call.1} parent=11 // pred_fallthru
          _
      $region12: #{tpu_custom_call.1} parent=5 // pred_fallthru
        _
      %p251 = scmp.lt.s32.totalorder %s20, 2
      // Predicated region
      $region33: #{tpu_custom_call.1} parent=5 // pred_check
        %p252 = pneg %p251
      $region34: #{tpu_custom_call.1} parent=5 // pred_check_branch
        %254 = sbr.rel (%p252) target = $region36
      $region35: #{tpu_custom_call.1} parent=5 // pred_region
        // Predicated region
        $region37: #{tpu_custom_call.1} parent=35 // pred_check
          %p255 = pneg %p40
        $region38: #{tpu_custom_call.1} parent=35 // pred_check_branch
          %257 = sbr.rel (%p255) target = $region40
        $region39: #{tpu_custom_call.1} parent=35 // pred_region
          %s258 = sand.u32 %s30, 1
          %s259 = scalar_lea.sflag [#allocation3], %s258
          %s260 = sand.u32 %s30, 1
          %s261 = smul.addr %s260, 8
          %s262 = scalar_lea.vmem [#allocation2], %s261
          %264 = vsyncadd %s259, 0
          %s265 = smul.addr %s20, 8
          %s266 = scalar_lea.hbm %s0, %s265
          %s268 = sshll.u32 %s266, 4
          %s269 = int_to_ptr.hbm [resolvable:$true] %s268
          %s270 = sshll.u32 %s262, 4
          %s271 = int_to_ptr.vmem [resolvable:$true] %s270
          %273 = dma.hbm_to_vmem [thread:$0]  %s269, 128, %s271, %s259
        $region40: #{tpu_custom_call.1} parent=35 // pred_fallthru
          _
      $region36: #{tpu_custom_call.1} parent=5 // pred_fallthru
        _
      %p274 = scmp.le.s32.totalorder 1, %s20
      %p275 = scmp.lt.s32.totalorder %s20, 3
      %p276 = pnand %p274, %p275
      %p277 = pneg %p276
      // Predicated region
      $region41: #{tpu_custom_call.1} parent=5 // pred_check
        _
      $region42: #{tpu_custom_call.1} parent=5 // pred_check_branch
        %279 = sbr.rel (%p276) target = $region44
      $region43: #{tpu_custom_call.1} parent=5 // pred_region
        %s280 = ssub.s32 %s20, 1
        %s281 = sand.u32 %s33, 1
        %s282 = scalar_lea.sflag [#allocation3], %s281
        %s283 = sand.u32 %s33, 1
        %s284 = smul.addr %s283, 8
        %s285 = scalar_lea.vmem [#allocation2], %s284
        // Predicated region
        $region45: #{tpu_custom_call.1} parent=43 // pred_check
          %p286 = pneg %p46
        $region46: #{tpu_custom_call.1} parent=43 // pred_check_branch
          %288 = sbr.rel (%p286) target = $region48
        $region47: #{tpu_custom_call.1} parent=43 // pred_region
          %290 = dma.done %s282, 128
        $region48: #{tpu_custom_call.1} parent=43 // pred_fallthru
          _
        // Predicated region
        $region49: #{tpu_custom_call.1} parent=43 // pred_check
          %p291 = pneg %p67
        $region50: #{tpu_custom_call.1} parent=43 // pred_check_branch
          %293 = sbr.rel (%p291) target = $region52
        $region51: #{tpu_custom_call.1} parent=43 // pred_region
          %295 = dma.done [#allocation6], 768
        $region52: #{tpu_custom_call.1} parent=43 // pred_fallthru
          _
        // Predicated region
        $region53: #{tpu_custom_call.1} parent=43 // pred_check
          %p296 = pneg %p88
        $region54: #{tpu_custom_call.1} parent=43 // pred_check_branch
          %298 = sbr.rel (%p296) target = $region56
        $region55: #{tpu_custom_call.1} parent=43 // pred_region
          %300 = dma.done [#allocation6], 48
        $region56: #{tpu_custom_call.1} parent=43 // pred_fallthru
          _
        // Predicated region
        $region57: #{tpu_custom_call.1} parent=43 // pred_check
          %p301 = pneg %p109
        $region58: #{tpu_custom_call.1} parent=43 // pred_check_branch
          %303 = sbr.rel (%p301) target = $region60
        $region59: #{tpu_custom_call.1} parent=43 // pred_region
          %305 = dma.done [#allocation9], 256
        $region60: #{tpu_custom_call.1} parent=43 // pred_fallthru
          _
        // Predicated region
        $region61: #{tpu_custom_call.1} parent=43 // pred_check
          %p306 = pneg %p151
        $region62: #{tpu_custom_call.1} parent=43 // pred_check_branch
          %308 = sbr.rel (%p306) target = $region64
        $region63: #{tpu_custom_call.1} parent=43 // pred_region
          %310 = dma.done [#allocation9], 256
        $region64: #{tpu_custom_call.1} parent=43 // pred_fallthru
          _
        %s311 = sand.u32 %s33, 1
        %s312 = scalar_lea.sflag [#allocation3], %s311
        %s313 = sand.u32 %s33, 1
        %s314 = smul.addr %s313, 8
        %s315 = scalar_lea.vmem [#allocation2], %s314
        %p316 = pneg %p46
        %p317 = pneg %p43
        %p318 = pneg %p67
        %p319 = pneg %p64
        %p320 = pneg %p88
        %p321 = pneg %p85
        %p322 = pneg %p109
        %p323 = pneg %p106
        %p324 = pneg %p130
        %p325 = pneg %p127
        %p326 = pneg %p151
        %p327 = pneg %p148
        %p328 = pneg %p177
        %p329 = pneg %p174
        %s330 = sand.u32 %s164, 1
        %s331 = scalar_lea.sflag [#allocation4], %s330
        %s332 = sand.u32 %s164, 1
        %s333 = smul.addr %s332, 8
        %s334 = scalar_lea.vmem [#allocation11], %s333
        %v336 = vld [vmem:[%s285] sm:$0xff]
        %v337 = vpack.c.bf16 %v336, %v336
        %v338 = vld [vmem:[#allocation5] sm:$0xf]
        %v339 = vld [vmem:[#allocation5 + $0x4] sm:$0xf]
        %v340 = vld [vmem:[#allocation5 + $0x8] sm:$0xf]
        %v341 = vld [vmem:[#allocation5 + $0xc] sm:$0xf]
        %v342 = vld [vmem:[#allocation7] sm:$0x1]
        %v344 = vperm.slane %v342, 0
        %v350 = vunpack.c.l.b16 %v338
        %v351 = vunpack.c.l.b16 %v339
        %v352 = vunpack.c.l.b16 %v340
        %v353 = vunpack.c.l.b16 %v341
        %v354 = vpack.c.b16 %v351, %v350
        %v355 = vpack.c.b16 %v353, %v352
        %vm358 = vcmask 261120
        %v360 = vsel %vm358, %v337, 0
        %362 = vmatpush.bf16.msra.mxu0 0
        %363 = vmatpush.bf16.msra.mxu0 0
        %364 = vmatpush.bf16.msra.mxu0 0
        %365 = vmatpush.bf16.msra.mxu0 0
        %366 = vmatpush.bf16.msra.mxu0 0
        %367 = vmatpush.bf16.msra.mxu0 0
        %368 = vmatpush.bf16.msra.mxu0 %v355
        %369 = vmatpush.bf16.msra.mxu0 %v354
        %370 = vmatmul.bf16.gmra.mxu0 %v360
        %v371 = vpop.f32.mrf.mxu0
        %v372 = vadd.f32 %v344, %v371
        %v373 = vpop.f32.mrf.mxu0
        %374 = vdwg.mxu0
        %v375 = vpack.c.bf16 %v372, %v372
        %377 = vrot.lane.b32.xlu0 %v375, 120
        %v378 = vpop.permute.xlu0 %377
        %379 = vrot.lane.b32.xlu0 %v375, 112
        %v380 = vpop.permute.xlu0 %379
        %381 = vrot.lane.b32.xlu0 %v375, 104
        %v382 = vpop.permute.xlu0 %381
        %v385 = vpack.i.b16 %v378, %v375
        %v386 = vshrl.u32 %v375, 16
        %v387 = vshrl.u32 %v378, 16
        %v388 = vpack.i.b16 %v387, %v386
        %v391 = vpack.i.b16 %v382, %v380
        %v392 = vshrl.u32 %v380, 16
        %v393 = vshrl.u32 %v382, 16
        %v394 = vpack.i.b16 %v393, %v392
        %v397 = vunpack.c.l.s4 1983009808
        %v398 = vunpack.c.0.s8 %v397
        %v399 = vperm.slane %v385, %v398
        %v402 = vunpack.c.l.s4 1983009808
        %v403 = vunpack.c.0.s8 %v402
        %v404 = vperm.slane %v391, %v403
        %v405 = vrot.slane %v404, 4
        %vm406 = vcmask 1047556
        %v407 = vsel %vm406, %v405, %v399
        %v408 = vrot.slane %v399, 4
        %v409 = vsel %vm406, %v404, %v408
        %v411 = vunpack.c.l.s4 1934713408
        %v412 = vunpack.c.0.s8 %v411
        %v413 = vperm.slane %v407, %v412
        %v415 = vunpack.c.l.s4 1934713408
        %v416 = vunpack.c.0.s8 %v415
        %v417 = vperm.slane %v409, %v416
        %v418 = vrot.slane %v413, 4
        %v419 = vsel %vm406, 0, %v418
        %v420 = vrot.slane %v417, 4
        %v421 = vsel %vm406, 0, %v420
        %v424 = vunpack.c.l.s4 1983009808
        %v425 = vunpack.c.0.s8 %v424
        %v426 = vperm.slane %v388, %v425
        %v429 = vunpack.c.l.s4 1983009808
        %v430 = vunpack.c.0.s8 %v429
        %v431 = vperm.slane %v394, %v430
        %v432 = vrot.slane %v431, 4
        %v433 = vsel %vm406, %v432, %v426
        %v434 = vrot.slane %v426, 4
        %v435 = vsel %vm406, %v431, %v434
        %v437 = vunpack.c.l.s4 1934713408
        %v438 = vunpack.c.0.s8 %v437
        %v439 = vperm.slane %v433, %v438
        %v441 = vunpack.c.l.s4 1934713408
        %v442 = vunpack.c.0.s8 %v441
        %v443 = vperm.slane %v435, %v442
        %v444 = vrot.slane %v439, 4
        %v445 = vsel %vm406, 0, %v444
        %v446 = vrot.slane %v443, 4
        %v447 = vsel %vm406, 0, %v446
        %v448 = vsel %vm406, %v420, %v413
        %v450 = vunpack.c.l.s4 1983009808
        %v451 = vunpack.c.0.s8 %v450
        %v452 = vperm.slane %v448, %v451
        %v453 = vrot.slane %v421, 4
        %v454 = vsel %vm406, %v453, %v419
        %v456 = vunpack.c.l.s4 1983009808
        %v457 = vunpack.c.0.s8 %v456
        %v458 = vperm.slane %v454, %v457
        %v459 = vrot.slane %v458, 4
        %v460 = vsel %vm406, %v459, %v452
        %v462 = vunpack.c.l.s4 1934713408
        %v463 = vunpack.c.0.s8 %v462
        %v464 = vperm.slane %v460, %v463
        %v465 = vrot.slane %v464, 4
        %v466 = vsel %vm406, 0, %v465
        %v467 = vsel %vm406, %v446, %v439
        %v469 = vunpack.c.l.s4 1983009808
        %v470 = vunpack.c.0.s8 %v469
        %v471 = vperm.slane %v467, %v470
        %v472 = vrot.slane %v447, 4
        %v473 = vsel %vm406, %v472, %v445
        %v475 = vunpack.c.l.s4 1983009808
        %v476 = vunpack.c.0.s8 %v475
        %v477 = vperm.slane %v473, %v476
        %v478 = vrot.slane %v477, 4
        %v479 = vsel %vm406, %v478, %v471
        %v481 = vunpack.c.l.s4 1934713408
        %v482 = vunpack.c.0.s8 %v481
        %v483 = vperm.slane %v479, %v482
        %v484 = vrot.slane %v483, 4
        %v485 = vsel %vm406, 0, %v484
        %v488 = vpack.i.b16 %v483, %v464
        %v489 = vshrl.u32 %v464, 16
        %v490 = vshrl.u32 %v483, 16
        %v491 = vpack.i.b16 %v490, %v489
        %v494 = vpack.i.b16 %v485, %v466
        %v495 = vshrl.u32 %v466, 16
        %v496 = vshrl.u32 %v485, 16
        %v497 = vpack.i.b16 %v496, %v495
        %s498 = scalar_lea.vmem [#allocation5], 16
        %v499 = vld [vmem:[%s498] sm:$0xf]
        %v500 = vld [vmem:[%s498 + $0x4] sm:$0xf]
        %v501 = vld [vmem:[%s498 + $0x8] sm:$0xf]
        %v502 = vld [vmem:[%s498 + $0xc] sm:$0xf]
        %s503 = scalar_lea.vmem [#allocation7], 1
        %v504 = vld [vmem:[%s503] sm:$0x1]
        %v506 = vperm.slane %v504, 0
        %v512 = vunpack.c.l.b16 %v499
        %v513 = vunpack.c.l.b16 %v500
        %v514 = vunpack.c.l.b16 %v501
        %v515 = vunpack.c.l.b16 %v502
        %v516 = vpack.c.b16 %v513, %v512
        %v517 = vpack.c.b16 %v515, %v514
        %520 = vmatpush.bf16.msra.mxu0 0
        %521 = vmatpush.bf16.msra.mxu0 0
        %522 = vmatpush.bf16.msra.mxu0 0
        %523 = vmatpush.bf16.msra.mxu0 0
        %524 = vmatpush.bf16.msra.mxu0 0
        %525 = vmatpush.bf16.msra.mxu0 0
        %526 = vmatpush.bf16.msra.mxu0 %v517
        %527 = vmatpush.bf16.msra.mxu0 %v516
        %528 = vmatmul.bf16.gmra.mxu0 %v360
        %v529 = vpop.f32.mrf.mxu0
        %v530 = vadd.f32 %v506, %v529
        %v531 = vpop.f32.mrf.mxu0
        %532 = vdwg.mxu0
        %v533 = vpack.c.bf16 %v530, %v530
        %535 = vrot.lane.b32.xlu0 %v533, 120
        %v536 = vpop.permute.xlu0 %535
        %537 = vrot.lane.b32.xlu0 %v533, 112
        %v538 = vpop.permute.xlu0 %537
        %539 = vrot.lane.b32.xlu0 %v533, 104
        %v540 = vpop.permute.xlu0 %539
        %v543 = vpack.i.b16 %v536, %v533
        %v544 = vshrl.u32 %v533, 16
        %v545 = vshrl.u32 %v536, 16
        %v546 = vpack.i.b16 %v545, %v544
        %v549 = vpack.i.b16 %v540, %v538
        %v550 = vshrl.u32 %v538, 16
        %v551 = vshrl.u32 %v540, 16
        %v552 = vpack.i.b16 %v551, %v550
        %v555 = vunpack.c.l.s4 1983009808
        %v556 = vunpack.c.0.s8 %v555
        %v557 = vperm.slane %v543, %v556
        %v560 = vunpack.c.l.s4 1983009808
        %v561 = vunpack.c.0.s8 %v560
        %v562 = vperm.slane %v549, %v561
        %v563 = vrot.slane %v562, 4
        %v564 = vsel %vm406, %v563, %v557
        %v565 = vrot.slane %v557, 4
        %v566 = vsel %vm406, %v562, %v565
        %v568 = vunpack.c.l.s4 1934713408
        %v569 = vunpack.c.0.s8 %v568
        %v570 = vperm.slane %v564, %v569
        %v572 = vunpack.c.l.s4 1934713408
        %v573 = vunpack.c.0.s8 %v572
        %v574 = vperm.slane %v566, %v573
        %v575 = vrot.slane %v570, 4
        %v576 = vsel %vm406, 0, %v575
        %v577 = vrot.slane %v574, 4
        %v578 = vsel %vm406, 0, %v577
        %v581 = vunpack.c.l.s4 1983009808
        %v582 = vunpack.c.0.s8 %v581
        %v583 = vperm.slane %v546, %v582
        %v586 = vunpack.c.l.s4 1983009808
        %v587 = vunpack.c.0.s8 %v586
        %v588 = vperm.slane %v552, %v587
        %v589 = vrot.slane %v588, 4
        %v590 = vsel %vm406, %v589, %v583
        %v591 = vrot.slane %v583, 4
        %v592 = vsel %vm406, %v588, %v591
        %v594 = vunpack.c.l.s4 1934713408
        %v595 = vunpack.c.0.s8 %v594
        %v596 = vperm.slane %v590, %v595
        %v598 = vunpack.c.l.s4 1934713408
        %v599 = vunpack.c.0.s8 %v598
        %v600 = vperm.slane %v592, %v599
        %v601 = vrot.slane %v596, 4
        %v602 = vsel %vm406, 0, %v601
        %v603 = vrot.slane %v600, 4
        %v604 = vsel %vm406, 0, %v603
        %v605 = vsel %vm406, %v577, %v570
        %v607 = vunpack.c.l.s4 1983009808
        %v608 = vunpack.c.0.s8 %v607
        %v609 = vperm.slane %v605, %v608
        %v610 = vrot.slane %v578, 4
        %v611 = vsel %vm406, %v610, %v576
        %v613 = vunpack.c.l.s4 1983009808
        %v614 = vunpack.c.0.s8 %v613
        %v615 = vperm.slane %v611, %v614
        %v616 = vrot.slane %v615, 4
        %v617 = vsel %vm406, %v616, %v609
        %v619 = vunpack.c.l.s4 1934713408
        %v620 = vunpack.c.0.s8 %v619
        %v621 = vperm.slane %v617, %v620
        %v622 = vrot.slane %v621, 4
        %v623 = vsel %vm406, 0, %v622
        %v624 = vsel %vm406, %v603, %v596
        %v626 = vunpack.c.l.s4 1983009808
        %v627 = vunpack.c.0.s8 %v626
        %v628 = vperm.slane %v624, %v627
        %v629 = vrot.slane %v604, 4
        %v630 = vsel %vm406, %v629, %v602
        %v632 = vunpack.c.l.s4 1983009808
        %v633 = vunpack.c.0.s8 %v632
        %v634 = vperm.slane %v630, %v633
        %v635 = vrot.slane %v634, 4
        %v636 = vsel %vm406, %v635, %v628
        %v638 = vunpack.c.l.s4 1934713408
        %v639 = vunpack.c.0.s8 %v638
        %v640 = vperm.slane %v636, %v639
        %v641 = vrot.slane %v640, 4
        %v642 = vsel %vm406, 0, %v641
        %v645 = vpack.i.b16 %v640, %v621
        %v646 = vshrl.u32 %v621, 16
        %v647 = vshrl.u32 %v640, 16
        %v648 = vpack.i.b16 %v647, %v646
        %v651 = vpack.i.b16 %v642, %v623
        %v652 = vshrl.u32 %v623, 16
        %v653 = vshrl.u32 %v642, 16
        %v654 = vpack.i.b16 %v653, %v652
        %s655 = scalar_lea.vmem [#allocation5], 32
        %v656 = vld [vmem:[%s655] sm:$0xf]
        %v657 = vld [vmem:[%s655 + $0x4] sm:$0xf]
        %v658 = vld [vmem:[%s655 + $0x8] sm:$0xf]
        %v659 = vld [vmem:[%s655 + $0xc] sm:$0xf]
        %s660 = scalar_lea.vmem [#allocation7], 2
        %v661 = vld [vmem:[%s660] sm:$0x1]
        %v663 = vperm.slane %v661, 0
        %v669 = vunpack.c.l.b16 %v656
        %v670 = vunpack.c.l.b16 %v657
        %v671 = vunpack.c.l.b16 %v658
        %v672 = vunpack.c.l.b16 %v659
        %v673 = vpack.c.b16 %v670, %v669
        %v674 = vpack.c.b16 %v672, %v671
        %677 = vmatpush.bf16.msra.mxu0 0
        %678 = vmatpush.bf16.msra.mxu0 0
        %679 = vmatpush.bf16.msra.mxu0 0
        %680 = vmatpush.bf16.msra.mxu0 0
        %681 = vmatpush.bf16.msra.mxu0 0
        %682 = vmatpush.bf16.msra.mxu0 0
        %683 = vmatpush.bf16.msra.mxu0 %v674
        %684 = vmatpush.bf16.msra.mxu0 %v673
        %685 = vmatmul.bf16.gmra.mxu0 %v360
        %v686 = vpop.f32.mrf.mxu0
        %v687 = vadd.f32 %v663, %v686
        %v688 = vpop.f32.mrf.mxu0
        %689 = vdwg.mxu0
        %v690 = vpack.c.bf16 %v687, %v687
        %692 = vrot.lane.b32.xlu0 %v690, 120
        %v693 = vpop.permute.xlu0 %692
        %694 = vrot.lane.b32.xlu0 %v690, 112
        %v695 = vpop.permute.xlu0 %694
        %696 = vrot.lane.b32.xlu0 %v690, 104
        %v697 = vpop.permute.xlu0 %696
        %v700 = vpack.i.b16 %v693, %v690
        %v701 = vshrl.u32 %v690, 16
        %v702 = vshrl.u32 %v693, 16
        %v703 = vpack.i.b16 %v702, %v701
        %v706 = vpack.i.b16 %v697, %v695
        %v707 = vshrl.u32 %v695, 16
        %v708 = vshrl.u32 %v697, 16
        %v709 = vpack.i.b16 %v708, %v707
        %v712 = vunpack.c.l.s4 1983009808
        %v713 = vunpack.c.0.s8 %v712
        %v714 = vperm.slane %v700, %v713
        %v717 = vunpack.c.l.s4 1983009808
        %v718 = vunpack.c.0.s8 %v717
        %v719 = vperm.slane %v706, %v718
        %v720 = vrot.slane %v719, 4
        %v721 = vsel %vm406, %v720, %v714
        %v722 = vrot.slane %v714, 4
        %v723 = vsel %vm406, %v719, %v722
        %v725 = vunpack.c.l.s4 1934713408
        %v726 = vunpack.c.0.s8 %v725
        %v727 = vperm.slane %v721, %v726
        %v729 = vunpack.c.l.s4 1934713408
        %v730 = vunpack.c.0.s8 %v729
        %v731 = vperm.slane %v723, %v730
        %v732 = vrot.slane %v727, 4
        %v733 = vsel %vm406, 0, %v732
        %v734 = vrot.slane %v731, 4
        %v735 = vsel %vm406, 0, %v734
        %v738 = vunpack.c.l.s4 1983009808
        %v739 = vunpack.c.0.s8 %v738
        %v740 = vperm.slane %v703, %v739
        %v743 = vunpack.c.l.s4 1983009808
        %v744 = vunpack.c.0.s8 %v743
        %v745 = vperm.slane %v709, %v744
        %v746 = vrot.slane %v745, 4
        %v747 = vsel %vm406, %v746, %v740
        %v748 = vrot.slane %v740, 4
        %v749 = vsel %vm406, %v745, %v748
        %v751 = vunpack.c.l.s4 1934713408
        %v752 = vunpack.c.0.s8 %v751
        %v753 = vperm.slane %v747, %v752
        %v755 = vunpack.c.l.s4 1934713408
        %v756 = vunpack.c.0.s8 %v755
        %v757 = vperm.slane %v749, %v756
        %v758 = vrot.slane %v753, 4
        %v759 = vsel %vm406, 0, %v758
        %v760 = vrot.slane %v757, 4
        %v761 = vsel %vm406, 0, %v760
        %v762 = vsel %vm406, %v734, %v727
        %v764 = vunpack.c.l.s4 1983009808
        %v765 = vunpack.c.0.s8 %v764
        %v766 = vperm.slane %v762, %v765
        %v767 = vrot.slane %v735, 4
        %v768 = vsel %vm406, %v767, %v733
        %v770 = vunpack.c.l.s4 1983009808
        %v771 = vunpack.c.0.s8 %v770
        %v772 = vperm.slane %v768, %v771
        %v773 = vrot.slane %v772, 4
        %v774 = vsel %vm406, %v773, %v766
        %v776 = vunpack.c.l.s4 1934713408
        %v777 = vunpack.c.0.s8 %v776
        %v778 = vperm.slane %v774, %v777
        %v779 = vrot.slane %v778, 4
        %v780 = vsel %vm406, 0, %v779
        %v781 = vsel %vm406, %v760, %v753
        %v783 = vunpack.c.l.s4 1983009808
        %v784 = vunpack.c.0.s8 %v783
        %v785 = vperm.slane %v781, %v784
        %v786 = vrot.slane %v761, 4
        %v787 = vsel %vm406, %v786, %v759
        %v789 = vunpack.c.l.s4 1983009808
        %v790 = vunpack.c.0.s8 %v789
        %v791 = vperm.slane %v787, %v790
        %v792 = vrot.slane %v791, 4
        %v793 = vsel %vm406, %v792, %v785
        %v795 = vunpack.c.l.s4 1934713408
        %v796 = vunpack.c.0.s8 %v795
        %v797 = vperm.slane %v793, %v796
        %v798 = vrot.slane %v797, 4
        %v799 = vsel %vm406, 0, %v798
        %v802 = vpack.i.b16 %v797, %v778
        %v803 = vshrl.u32 %v778, 16
        %v804 = vshrl.u32 %v797, 16
        %v805 = vpack.i.b16 %v804, %v803
        %v808 = vpack.i.b16 %v799, %v780
        %v809 = vshrl.u32 %v780, 16
        %v810 = vshrl.u32 %v799, 16
        %v811 = vpack.i.b16 %v810, %v809
        %vm812 = vcmask 64512
        %v814 = vsel %vm812, %v488, 0
        %v817 = vsel %vm812, %v645, 0
        %819 = vmatpush.bf16.xpose.msra.mxu0 0
        %820 = vmatpush.bf16.xpose.msra.mxu0 0
        %821 = vmatpush.bf16.xpose.msra.mxu0 0
        %822 = vmatpush.bf16.xpose.msra.mxu0 0
        %823 = vmatpush.bf16.xpose.msra.mxu0 0
        %824 = vmatpush.bf16.xpose.msra.mxu0 0
        %825 = vmatpush.bf16.xpose.msra.mxu0 0
        %826 = vmatpush.bf16.xpose.msra.mxu0 %v817
        %827 = vmatmul.bf16.gmra.mxu0 %v814
        %v828 = vpop.f32.mrf.mxu0
        %v829 = vadd.f32 0.0, %v828
        %v830 = vpop.f32.mrf.mxu0
        %831 = vdwg.mxu0
        %v833 = vsel %vm812, %v491, 0
        %v836 = vsel %vm812, %v648, 0
        %838 = vmatpush.bf16.xpose.msra.mxu0 0
        %839 = vmatpush.bf16.xpose.msra.mxu0 0
        %840 = vmatpush.bf16.xpose.msra.mxu0 0
        %841 = vmatpush.bf16.xpose.msra.mxu0 0
        %842 = vmatpush.bf16.xpose.msra.mxu0 0
        %843 = vmatpush.bf16.xpose.msra.mxu0 0
        %844 = vmatpush.bf16.xpose.msra.mxu0 0
        %845 = vmatpush.bf16.xpose.msra.mxu0 %v836
        %846 = vmatmul.bf16.gmra.mxu0 %v833
        %v847 = vpop.f32.mrf.mxu0
        %v848 = vadd.f32 0.0, %v847
        %v849 = vpop.f32.mrf.mxu0
        %850 = vdwg.mxu0
        %v852 = vsel %vm812, %v494, 0
        %v855 = vsel %vm812, %v651, 0
        %857 = vmatpush.bf16.xpose.msra.mxu0 0
        %858 = vmatpush.bf16.xpose.msra.mxu0 0
        %859 = vmatpush.bf16.xpose.msra.mxu0 0
        %860 = vmatpush.bf16.xpose.msra.mxu0 0
        %861 = vmatpush.bf16.xpose.msra.mxu0 0
        %862 = vmatpush.bf16.xpose.msra.mxu0 0
        %863 = vmatpush.bf16.xpose.msra.mxu0 0
        %864 = vmatpush.bf16.xpose.msra.mxu0 %v855
        %865 = vmatmul.bf16.gmra.mxu0 %v852
        %v866 = vpop.f32.mrf.mxu0
        %v867 = vadd.f32 0.0, %v866
        %v868 = vpop.f32.mrf.mxu0
        %869 = vdwg.mxu0
        %v871 = vsel %vm812, %v497, 0
        %v874 = vsel %vm812, %v654, 0
        %876 = vmatpush.bf16.xpose.msra.mxu0 0
        %877 = vmatpush.bf16.xpose.msra.mxu0 0
        %878 = vmatpush.bf16.xpose.msra.mxu0 0
        %879 = vmatpush.bf16.xpose.msra.mxu0 0
        %880 = vmatpush.bf16.xpose.msra.mxu0 0
        %881 = vmatpush.bf16.xpose.msra.mxu0 0
        %882 = vmatpush.bf16.xpose.msra.mxu0 0
        %883 = vmatpush.bf16.xpose.msra.mxu0 %v874
        %884 = vmatmul.bf16.gmra.mxu0 %v871
        %v885 = vpop.f32.mrf.mxu0
        %v886 = vadd.f32 0.0, %v885
        %v887 = vpop.f32.mrf.mxu0
        %888 = vdwg.mxu0
        %v889 = vsel %vm812, %v829, -inf
        %890 = vmax.xlane.f32.xlu0 %v889
        %v891 = vpop.xlane.xlu0 %890
        %v892 = vsel %vm812, %v848, -inf
        %893 = vmax.xlane.f32.xlu0 %v892
        %v894 = vpop.xlane.xlu0 %893
        %v895 = vsel %vm812, %v867, -inf
        %896 = vmax.xlane.f32.xlu0 %v895
        %v897 = vpop.xlane.xlu0 %896
        %v898 = vsel %vm812, %v886, -inf
        %899 = vmax.xlane.f32.xlu0 %v898
        %v900 = vpop.xlane.xlu0 %899
        %v901 = vsub.f32 %v829, %v891
        %v902 = vsub.f32 %v848, %v894
        %v903 = vsub.f32 %v867, %v897
        %v904 = vsub.f32 %v886, %v900
        %v905 = vmul.f32 %v901, 1.442695
        %v906 = vpow.pop %v905
        %v907 = vmul.f32 %v902, 1.442695
        %v908 = vpow.pop %v907
        %v909 = vmul.f32 %v903, 1.442695
        %v910 = vpow.pop %v909
        %v911 = vmul.f32 %v904, 1.442695
        %v912 = vpow.pop %v911
        %v913 = vsel %vm812, %v906, 0.0
        %914 = vadd.xlane.f32.xlu0 %v913
        %v915 = vpop.xlane.xlu0 %914
        %v916 = vsel %vm812, %v908, 0.0
        %917 = vadd.xlane.f32.xlu0 %v916
        %v918 = vpop.xlane.xlu0 %917
        %v919 = vsel %vm812, %v910, 0.0
        %920 = vadd.xlane.f32.xlu0 %v919
        %v921 = vpop.xlane.xlu0 %920
        %v922 = vsel %vm812, %v912, 0.0
        %923 = vadd.xlane.f32.xlu0 %v922
        %v924 = vpop.xlane.xlu0 %923
        %v925 = vrcp.pop %v915
        %v926 = vrcp.pop %v918
        %v927 = vrcp.pop %v921
        %v928 = vrcp.pop %v924
        %v929 = vpack.c.bf16 %v906, %v906
        %v930 = vpack.c.bf16 %v908, %v908
        %v931 = vpack.c.bf16 %v910, %v910
        %v932 = vpack.c.bf16 %v912, %v912
        %v934 = vsel %vm812, %v929, 0
        %vm936 = vcmask 1043456
        %v938 = vsel %vm936, %v802, 0
        %940 = vmatpush.bf16.msra.mxu0 0
        %941 = vmatpush.bf16.msra.mxu0 0
        %942 = vmatpush.bf16.msra.mxu0 0
        %943 = vmatpush.bf16.msra.mxu0 0
        %944 = vmatpush.bf16.msra.mxu0 0
        %945 = vmatpush.bf16.msra.mxu0 0
        %946 = vmatpush.bf16.msra.mxu0 0
        %947 = vmatpush.bf16.msra.mxu0 %v938
        %948 = vmatmul.bf16.gmra.mxu0 %v934
        %v949 = vpop.f32.mrf.mxu0
        %v950 = vadd.f32 0.0, %v949
        %v951 = vpop.f32.mrf.mxu0
        %952 = vdwg.mxu0
        %v954 = vsel %vm812, %v930, 0
        %v957 = vsel %vm936, %v805, 0
        %959 = vmatpush.bf16.msra.mxu0 0
        %960 = vmatpush.bf16.msra.mxu0 0
        %961 = vmatpush.bf16.msra.mxu0 0
        %962 = vmatpush.bf16.msra.mxu0 0
        %963 = vmatpush.bf16.msra.mxu0 0
        %964 = vmatpush.bf16.msra.mxu0 0
        %965 = vmatpush.bf16.msra.mxu0 0
        %966 = vmatpush.bf16.msra.mxu0 %v957
        %967 = vmatmul.bf16.gmra.mxu0 %v954
        %v968 = vpop.f32.mrf.mxu0
        %v969 = vadd.f32 0.0, %v968
        %v970 = vpop.f32.mrf.mxu0
        %971 = vdwg.mxu0
        %v973 = vsel %vm812, %v931, 0
        %v976 = vsel %vm936, %v808, 0
        %978 = vmatpush.bf16.msra.mxu0 0
        %979 = vmatpush.bf16.msra.mxu0 0
        %980 = vmatpush.bf16.msra.mxu0 0
        %981 = vmatpush.bf16.msra.mxu0 0
        %982 = vmatpush.bf16.msra.mxu0 0
        %983 = vmatpush.bf16.msra.mxu0 0
        %984 = vmatpush.bf16.msra.mxu0 0
        %985 = vmatpush.bf16.msra.mxu0 %v976
        %986 = vmatmul.bf16.gmra.mxu0 %v973
        %v987 = vpop.f32.mrf.mxu0
        %v988 = vadd.f32 0.0, %v987
        %v989 = vpop.f32.mrf.mxu0
        %990 = vdwg.mxu0
        %v992 = vsel %vm812, %v932, 0
        %v995 = vsel %vm936, %v811, 0
        %997 = vmatpush.bf16.msra.mxu0 0
        %998 = vmatpush.bf16.msra.mxu0 0
        %999 = vmatpush.bf16.msra.mxu0 0
        %1000 = vmatpush.bf16.msra.mxu0 0
        %1001 = vmatpush.bf16.msra.mxu0 0
        %1002 = vmatpush.bf16.msra.mxu0 0
        %1003 = vmatpush.bf16.msra.mxu0 0
        %1004 = vmatpush.bf16.msra.mxu0 %v995
        %1005 = vmatmul.bf16.gmra.mxu0 %v992
        %v1006 = vpop.f32.mrf.mxu0
        %v1007 = vadd.f32 0.0, %v1006
        %v1008 = vpop.f32.mrf.mxu0
        %1009 = vdwg.mxu0
        %v1010 = vmul.f32 %v950, %v925
        %v1011 = vmul.f32 %v969, %v926
        %v1012 = vmul.f32 %v988, %v927
        %v1013 = vmul.f32 %v1007, %v928
        %v1014 = vpack.c.bf16 %v1010, %v1010
        %v1015 = vpack.c.bf16 %v1011, %v1011
        %v1016 = vpack.c.bf16 %v1012, %v1012
        %v1017 = vpack.c.bf16 %v1013, %v1013
        %v1018 = vld [vmem:[#allocation8] sm:$0xf]
        %v1019 = vld [vmem:[#allocation8 + $0x4] sm:$0xf]
        %v1020 = vld [vmem:[#allocation8 + $0x8] sm:$0xf]
        %v1021 = vld [vmem:[#allocation8 + $0xc] sm:$0xf]
        %v1023 = vsel %vm812, %v1014, 0
        %v1026 = vsel %vm936, %v1018, 0
        %1028 = vmatpush.bf16.msra.mxu0 0
        %1029 = vmatpush.bf16.msra.mxu0 0
        %1030 = vmatpush.bf16.msra.mxu0 0
        %1031 = vmatpush.bf16.msra.mxu0 0
        %1032 = vmatpush.bf16.msra.mxu0 0
        %1033 = vmatpush.bf16.msra.mxu0 0
        %1034 = vmatpush.bf16.msra.mxu0 0
        %1035 = vmatpush.bf16.msra.mxu0 %v1026
        %1036 = vmatmul.bf16.gmra.mxu0 %v1023
        %v1037 = vpop.f32.mrf.mxu0
        %v1038 = vadd.f32 0.0, %v1037
        %v1039 = vpop.f32.mrf.mxu0
        %1040 = vdwg.mxu0
        %v1042 = vsel %vm812, %v1015, 0
        %v1045 = vsel %vm936, %v1019, 0
        %1047 = vmatpush.bf16.msra.mxu0 0
        %1048 = vmatpush.bf16.msra.mxu0 0
        %1049 = vmatpush.bf16.msra.mxu0 0
        %1050 = vmatpush.bf16.msra.mxu0 0
        %1051 = vmatpush.bf16.msra.mxu0 0
        %1052 = vmatpush.bf16.msra.mxu0 0
        %1053 = vmatpush.bf16.msra.mxu0 0
        %1054 = vmatpush.bf16.msra.mxu0 %v1045
        %1055 = vmatmul.bf16.gmra.mxu0 %v1042
        %v1056 = vpop.f32.mrf.mxu0
        %v1057 = vadd.f32 0.0, %v1056
        %v1058 = vpop.f32.mrf.mxu0
        %1059 = vdwg.mxu0
        %v1061 = vsel %vm812, %v1016, 0
        %v1064 = vsel %vm936, %v1020, 0
        %1066 = vmatpush.bf16.msra.mxu0 0
        %1067 = vmatpush.bf16.msra.mxu0 0
        %1068 = vmatpush.bf16.msra.mxu0 0
        %1069 = vmatpush.bf16.msra.mxu0 0
        %1070 = vmatpush.bf16.msra.mxu0 0
        %1071 = vmatpush.bf16.msra.mxu0 0
        %1072 = vmatpush.bf16.msra.mxu0 0
        %1073 = vmatpush.bf16.msra.mxu0 %v1064
        %1074 = vmatmul.bf16.gmra.mxu0 %v1061
        %v1075 = vpop.f32.mrf.mxu0
        %v1076 = vadd.f32 0.0, %v1075
        %v1077 = vpop.f32.mrf.mxu0
        %1078 = vdwg.mxu0
        %v1080 = vsel %vm812, %v1017, 0
        %v1083 = vsel %vm936, %v1021, 0
        %1085 = vmatpush.bf16.msra.mxu0 0
        %1086 = vmatpush.bf16.msra.mxu0 0
        %1087 = vmatpush.bf16.msra.mxu0 0
        %1088 = vmatpush.bf16.msra.mxu0 0
        %1089 = vmatpush.bf16.msra.mxu0 0
        %1090 = vmatpush.bf16.msra.mxu0 0
        %1091 = vmatpush.bf16.msra.mxu0 0
        %1092 = vmatpush.bf16.msra.mxu0 %v1083
        %1093 = vmatmul.bf16.gmra.mxu0 %v1080
        %v1094 = vpop.f32.mrf.mxu0
        %v1095 = vadd.f32 0.0, %v1094
        %v1096 = vpop.f32.mrf.mxu0
        %1097 = vdwg.mxu0
        %v1098 = vsel %vm358, %v1038, 0.0
        %v1099 = vsel %vm358, %v1057, 0.0
        %v1100 = vadd.f32 %v1098, %v1099
        %v1101 = vsel %vm358, %v1076, 0.0
        %v1102 = vadd.f32 %v1100, %v1101
        %v1103 = vsel %vm358, %v1095, 0.0
        %v1104 = vadd.f32 %v1102, %v1103
        %v1105 = vld [vmem:[%s4] sm:$0x1]
        %v1107 = vperm.slane %v1105, 0
        %v1109 = vadd.f32 %v1104, %v1107
        %v1110 = vadd.f32 %v1109, %v336
        %v1111 = vpack.c.bf16 %v1110, %v1110
        %v1112 = vld [vmem:[#allocation10] sm:$0xf]
        %v1113 = vld [vmem:[#allocation10 + $0x4] sm:$0xf]
        %v1114 = vld [vmem:[#allocation10 + $0x8] sm:$0xf]
        %v1115 = vld [vmem:[#allocation10 + $0xc] sm:$0xf]
        %v1120 = vunpack.c.l.b16 %v1112
        %v1121 = vunpack.c.l.b16 %v1113
        %v1122 = vunpack.c.l.b16 %v1114
        %v1123 = vunpack.c.l.b16 %v1115
        %v1124 = vpack.c.b16 %v1121, %v1120
        %v1125 = vpack.c.b16 %v1123, %v1122
        %v1129 = vsel %vm358, %v1111, 0
        %1131 = vmatpush.bf16.msra.mxu0 0
        %1132 = vmatpush.bf16.msra.mxu0 0
        %1133 = vmatpush.bf16.msra.mxu0 0
        %1134 = vmatpush.bf16.msra.mxu0 0
        %1135 = vmatpush.bf16.msra.mxu0 0
        %1136 = vmatpush.bf16.msra.mxu0 0
        %1137 = vmatpush.bf16.msra.mxu0 %v1125
        %1138 = vmatpush.bf16.msra.mxu0 %v1124
        %1139 = vmatmul.bf16.gmra.mxu0 %v1129
        %v1140 = vpop.f32.mrf.mxu0
        %v1141 = vadd.f32 %v1110, %v1140
        %v1142 = vpop.f32.mrf.mxu0
        %1143 = vdwg.mxu0
        %1144 = vst.msk [vmem:[%s334] sm:$0xff] %vm358, %v1141
        %s1145 = sand.u32 %s164, 1
        %s1146 = scalar_lea.sflag [#allocation4], %s1145
        %s1147 = sand.u32 %s164, 1
        %s1148 = smul.addr %s1147, 8
        %s1149 = scalar_lea.vmem [#allocation11], %s1148
        // Predicated region
        $region65: #{tpu_custom_call.1} parent=43 // pred_check
          %p1150 = pneg %p174
        $region66: #{tpu_custom_call.1} parent=43 // pred_check_branch
          %1152 = sbr.rel (%p1150) target = $region68
        $region67: #{tpu_custom_call.1} parent=43 // pred_region
          %1154 = vsyncadd %s1146, 0
          %s1155 = smul.addr %s25, 8
          %s1156 = scalar_lea.hbm %s6, %s1155
          %s1158 = sshll.u32 %s1149, 4
          %s1159 = int_to_ptr.vmem [resolvable:$true] %s1158
          %s1160 = sshll.u32 %s1156, 4
          %s1161 = int_to_ptr.hbm [resolvable:$true] %s1160
          %1163 = dma.vmem_to_hbm [thread:$0]  %s1159, 128, %s1161, %s1146
        $region68: #{tpu_custom_call.1} parent=43 // pred_fallthru
          _
      $region44: #{tpu_custom_call.1} parent=5 // pred_fallthru
        _
      %p1164 = scmp.le.s32.totalorder 2, %s20
      // Predicated region
      $region69: #{tpu_custom_call.1} parent=5 // pred_check
        %p1165 = pneg %p1164
      $region70: #{tpu_custom_call.1} parent=5 // pred_check_branch
        %1167 = sbr.rel (%p1165) target = $region72
      $region71: #{tpu_custom_call.1} parent=5 // pred_region
        %s1168 = ssub.s32 %s20, 2
        // Predicated region
        $region73: #{tpu_custom_call.1} parent=71 // pred_check
          %p1169 = pneg %p180
        $region74: #{tpu_custom_call.1} parent=71 // pred_check_branch
          %1171 = sbr.rel (%p1169) target = $region76
        $region75: #{tpu_custom_call.1} parent=71 // pred_region
          %s1172 = sand.u32 %s165, 1
          %s1173 = scalar_lea.sflag [#allocation4], %s1172
          %s1174 = sand.u32 %s165, 1
          %s1175 = smul.addr %s1174, 8
          %s1176 = scalar_lea.vmem [#allocation11], %s1175
          %1178 = dma.done %s1173, 128
        $region76: #{tpu_custom_call.1} parent=71 // pred_fallthru
          _
      $region72: #{tpu_custom_call.1} parent=5 // pred_fallthru
        _
    $region6: #{tpu_custom_call.1} parent=1 // loop_footer
      %s24 = sadd.s32 1, %s20
    $region7: #{tpu_custom_call.1} parent=1 // loop_footer_branch
      %19 = sbr.rel target = $region3
    $region8: #{tpu_custom_call.1} parent=1 // loop_exit
      _
    %1179 = vsyncpa [#allocation3], 1
    %s1180 = scalar_lea.sflag [#allocation3], 1
    %1181 = vsyncpa %s1180, 1
    %1182 = vsyncpa [#allocation6], 1
    %1183 = vsyncpa [#allocation9], 1
    %1184 = vsyncpa [#allocation4], 1
    %s1185 = scalar_lea.sflag [#allocation4], 1
    %1186 = vsyncpa %s1185, 1

// kernel: tpu_custom_call.1
$region0: #{tpu_custom_call.1}
  #allocation0 [shape = 'u32[]', space=smem, size = 0x4, offset = 0x4, fixed_abs, tag = 'smem constant byte address 0x4 - core index']
  #allocation1 [shape = 'u32[72,128]{1,0:T(1,128)}', space=vmem, size = 0x9000, scoped, tag = 'internal scratch']
  %s0 = inlined_call_operand.hbm [shape: f32[2,8,32], index: 0, kind: input, shape index: {}]
  %s1 = inlined_call_operand.hbm [shape: bf16[3,32,32], index: 1, kind: input, shape index: {}]
  %s2 = inlined_call_operand.hbm [shape: f32[3,1,32], index: 2, kind: input, shape index: {}]
  %s3 = inlined_call_operand.hbm [shape: bf16[4,8,32], index: 3, kind: input, shape index: {}]
  %s4 = inlined_call_operand.vmem [shape: f32[1,32], index: 4, kind: input, shape index: {}]
  %s5 = inlined_call_operand.hbm [shape: bf16[32,32], index: 5, kind: input, shape index: {}]
  %s6 = inlined_call_operand.hbm [shape: f32[2,8,32], index: 6, kind: output, shape index: {}]
  %s7 = sld [smem:[#allocation0]]
  $region77: #{tpu_custom_call.1} parent=0
    _
  %s9 = ssub.s32 1, %s7
  %s10 = scalar_select 0, %s9, %s7
  $region1: #{tpu_custom_call.1} parent=0
    #allocation2 [shape = 'u8[8192]{0}', space=vmem, size = 0x2000, scoped, tag = 'input window, operand 0']
    #allocation3 [shape = 's32[2]{0}', space=sflag, size = 0x8, scoped, tag = 'scoped memory for tpu_custom_call.1']
    #allocation4 [shape = 's32[2]{0}', space=sflag, size = 0x8, scoped, tag = 'scoped memory for tpu_custom_call.1']
    #allocation5 [shape = 'u8[24576]{0}', space=vmem, size = 0x6000, scoped, tag = 'input window, operand 1, single buffered']
    #allocation6 [shape = 's32[1]{0}', space=sflag, size = 0x4, scoped, tag = 'scoped memory for tpu_custom_call.1']
    #allocation7 [shape = 'u8[1536]{0}', space=vmem, size = 0x800, scoped, tag = 'input window, operand 2, single buffered']
    #allocation8 [shape = 'u8[8192]{0}', space=vmem, size = 0x2000, scoped, tag = 'input window, operand 3, single buffered']
    #allocation9 [shape = 's32[1]{0}', space=sflag, size = 0x4, scoped, tag = 'scoped memory for tpu_custom_call.1']
    #allocation10 [shape = 'u8[8192]{0}', space=vmem, size = 0x2000, scoped, tag = 'input window, operand 5, single buffered']
    #allocation11 [shape = 'u8[8192]{0}', space=vmem, size = 0x2000, scoped, tag = 'output window, operand 0']
    %11 = vsyncpa [#allocation3], 0
    %s12 = scalar_lea.sflag [#allocation3], 1
    %13 = vsyncpa %s12, 0
    %14 = vsyncpa [#allocation6], 0
    %15 = vsyncpa [#allocation9], 0
    %16 = vsyncpa [#allocation4], 0
    %s17 = scalar_lea.sflag [#allocation4], 1
    %18 = vsyncpa %s17, 0
    loop: start=0, step=1, limit=4
    $region2: #{tpu_custom_call.1} parent=1 // loop_pre_header
      _
    $region3: #{tpu_custom_call.1} parent=1 // loop_header
      %s20 = sphi 0, %s24
      %p21 = scmp.ge.s32.totalorder %s20, 4
      %s30 = sphi 0, %s32
      %s33 = sphi 0, %s30
      %s34 = sphi 0, %s33
      %s50 = sphi 0, %s34
      %s54 = sphi 0, %s54
      %s56 = sphi 0, %s54
      %s57 = sphi 0, %s56
      %s71 = sphi 0, %s57
      %s75 = sphi 0, %s75
      %s77 = sphi 0, %s75
      %s78 = sphi 0, %s77
      %s92 = sphi 0, %s78
      %s96 = sphi 0, %s96
      %s98 = sphi 0, %s96
      %s99 = sphi 0, %s98
      %s113 = sphi 0, %s99
      %s117 = sphi 0, %s117
      %s119 = sphi 0, %s117
      %s120 = sphi 0, %s119
      %s134 = sphi 0, %s120
      %s138 = sphi 0, %s138
      %s140 = sphi 0, %s138
      %s141 = sphi 0, %s140
      %s155 = sphi 0, %s141
      %s161 = sphi 0, %s163
      %s164 = sphi 0, %s161
      %s165 = sphi 0, %s164
      %s181 = sphi 0, %s165
    $region4: #{tpu_custom_call.1} parent=1 // loop_header_branch
      %23 = sbr.rel (%p21) target = $region8
    $region5: #{tpu_custom_call.1} parent=1 // loop_body
      %s25 = ssub.s32 %s20, 1
      %s26 = ssub.s32 %s20, 2
      %s27 = sadd.s32 %s20, 1
      %s28 = ssub.s32 %s20, %s27
      %p29 = scmp.eq.s32.totalorder %s28, 0
      %s31 = sadd.s32 %s30, 1
      %s32 = scalar_select %p29, %s30, %s31
      %p35 = pneg %p29
      %p36 = scmp.eq.s32.totalorder %s20, 1
      %p37 = por %p35, %p36
      %p38 = scmp.ne.s32.totalorder %s30, %s33
      %p39 = scmp.eq.s32.totalorder %s20, 0
      %p40 = por %p38, %p39
      %p41 = scmp.ne.s32.totalorder %s30, %s33
      %p42 = scmp.eq.s32.totalorder %s25, 1
      %p43 = por %p41, %p42
      %p44 = scmp.ne.s32.totalorder %s33, %s34
      %p45 = scmp.eq.s32.totalorder %s25, 0
      %p46 = por %p44, %p45
      %p47 = scmp.ne.s32.totalorder %s33, %s34
      %p48 = scmp.eq.s32.totalorder %s26, 1
      %p49 = por %p47, %p48
      %p51 = scmp.ne.s32.totalorder %s34, %s50
      %p52 = scmp.eq.s32.totalorder %s26, 0
      %p53 = por %p51, %p52
      %s55 = sadd.s32 %s54, 1
      %p58 = scmp.eq.s32.totalorder %s20, 1
      %p59 = scmp.ne.s32.totalorder %s54, %s56
      %p60 = scmp.eq.s32.totalorder %s20, 0
      %p61 = por %p59, %p60
      %p62 = scmp.ne.s32.totalorder %s54, %s56
      %p63 = scmp.eq.s32.totalorder %s25, 1
      %p64 = por %p62, %p63
      %p65 = scmp.ne.s32.totalorder %s56, %s57
      %p66 = scmp.eq.s32.totalorder %s25, 0
      %p67 = por %p65, %p66
      %p68 = scmp.ne.s32.totalorder %s56, %s57
      %p69 = scmp.eq.s32.totalorder %s26, 1
      %p70 = por %p68, %p69
      %p72 = scmp.ne.s32.totalorder %s57, %s71
      %p73 = scmp.eq.s32.totalorder %s26, 0
      %p74 = por %p72, %p73
      %s76 = sadd.s32 %s75, 1
      %p79 = scmp.eq.s32.totalorder %s20, 1
      %p80 = scmp.ne.s32.totalorder %s75, %s77
      %p81 = scmp.eq.s32.totalorder %s20, 0
      %p82 = por %p80, %p81
      %p83 = scmp.ne.s32.totalorder %s75, %s77
      %p84 = scmp.eq.s32.totalorder %s25, 1
      %p85 = por %p83, %p84
      %p86 = scmp.ne.s32.totalorder %s77, %s78
      %p87 = scmp.eq.s32.totalorder %s25, 0
      %p88 = por %p86, %p87
      %p89 = scmp.ne.s32.totalorder %s77, %s78
      %p90 = scmp.eq.s32.totalorder %s26, 1
      %p91 = por %p89, %p90
      %p93 = scmp.ne.s32.totalorder %s78, %s92
      %p94 = scmp.eq.s32.totalorder %s26, 0
      %p95 = por %p93, %p94
      %s97 = sadd.s32 %s96, 1
      %p100 = scmp.eq.s32.totalorder %s20, 1
      %p101 = scmp.ne.s32.totalorder %s96, %s98
      %p102 = scmp.eq.s32.totalorder %s20, 0
      %p103 = por %p101, %p102
      %p104 = scmp.ne.s32.totalorder %s96, %s98
      %p105 = scmp.eq.s32.totalorder %s25, 1
      %p106 = por %p104, %p105
      %p107 = scmp.ne.s32.totalorder %s98, %s99
      %p108 = scmp.eq.s32.totalorder %s25, 0
      %p109 = por %p107, %p108
      %p110 = scmp.ne.s32.totalorder %s98, %s99
      %p111 = scmp.eq.s32.totalorder %s26, 1
      %p112 = por %p110, %p111
      %p114 = scmp.ne.s32.totalorder %s99, %s113
      %p115 = scmp.eq.s32.totalorder %s26, 0
      %p116 = por %p114, %p115
      %s118 = sadd.s32 %s117, 1
      %p121 = scmp.eq.s32.totalorder %s20, 1
      %p122 = scmp.ne.s32.totalorder %s117, %s119
      %p123 = scmp.eq.s32.totalorder %s20, 0
      %p124 = por %p122, %p123
      %p125 = scmp.ne.s32.totalorder %s117, %s119
      %p126 = scmp.eq.s32.totalorder %s25, 1
      %p127 = por %p125, %p126
      %p128 = scmp.ne.s32.totalorder %s119, %s120
      %p129 = scmp.eq.s32.totalorder %s25, 0
      %p130 = por %p128, %p129
      %p131 = scmp.ne.s32.totalorder %s119, %s120
      %p132 = scmp.eq.s32.totalorder %s26, 1
      %p133 = por %p131, %p132
      %p135 = scmp.ne.s32.totalorder %s120, %s134
      %p136 = scmp.eq.s32.totalorder %s26, 0
      %p137 = por %p135, %p136
      %s139 = sadd.s32 %s138, 1
      %p142 = scmp.eq.s32.totalorder %s20, 1
      %p143 = scmp.ne.s32.totalorder %s138, %s140
      %p144 = scmp.eq.s32.totalorder %s20, 0
      %p145 = por %p143, %p144
      %p146 = scmp.ne.s32.totalorder %s138, %s140
      %p147 = scmp.eq.s32.totalorder %s25, 1
      %p148 = por %p146, %p147
      %p149 = scmp.ne.s32.totalorder %s140, %s141
      %p150 = scmp.eq.s32.totalorder %s25, 0
      %p151 = por %p149, %p150
      %p152 = scmp.ne.s32.totalorder %s140, %s141
      %p153 = scmp.eq.s32.totalorder %s26, 1
      %p154 = por %p152, %p153
      %p156 = scmp.ne.s32.totalorder %s141, %s155
      %p157 = scmp.eq.s32.totalorder %s26, 0
      %p158 = por %p156, %p157
      %s159 = ssub.s32 %s20, %s27
      %p160 = scmp.eq.s32.totalorder %s159, 0
      %s162 = sadd.s32 %s161, 1
      %s163 = scalar_select %p160, %s161, %s162
      %p166 = pneg %p160
      %p167 = scmp.eq.s32.totalorder %s20, 1
      %p168 = por %p166, %p167
      %p169 = scmp.ne.s32.totalorder %s161, %s164
      %p170 = scmp.eq.s32.totalorder %s20, 0
      %p171 = por %p169, %p170
      %p172 = scmp.ne.s32.totalorder %s161, %s164
      %p173 = scmp.eq.s32.totalorder %s25, 1
      %p174 = por %p172, %p173
      %p175 = scmp.ne.s32.totalorder %s164, %s165
      %p176 = scmp.eq.s32.totalorder %s25, 0
      %p177 = por %p175, %p176
      %p178 = scmp.ne.s32.totalorder %s164, %s165
      %p179 = scmp.eq.s32.totalorder %s26, 1
      %p180 = por %p178, %p179
      %p182 = scmp.ne.s32.totalorder %s165, %s181
      %p183 = scmp.eq.s32.totalorder %s26, 0
      %p184 = por %p182, %p183
      %p185 = scmp.le.s32.totalorder 1, %s20
      %p186 = scmp.lt.s32.totalorder %s20, 3
      %p187 = pnand %p185, %p186
      %p188 = pneg %p187
      // Predicated region
      $region9: #{tpu_custom_call.1} parent=5 // pred_check
        _
      $region10: #{tpu_custom_call.1} parent=5 // pred_check_branch
        %190 = sbr.rel (%p187) target = $region12
      $region11: #{tpu_custom_call.1} parent=5 // pred_region
        %s191 = ssub.s32 %s20, 1
        // Predicated region
        $region13: #{tpu_custom_call.1} parent=11 // pred_check
          %p192 = pneg %p67
        $region14: #{tpu_custom_call.1} parent=11 // pred_check_branch
          %194 = sbr.rel (%p192) target = $region16
        $region15: #{tpu_custom_call.1} parent=11 // pred_region
          %196 = vsyncadd [#allocation6], 0
          %s197 = sshll.u32 %s1, 4
          %s198 = int_to_ptr.hbm [resolvable:$true] %s197
          %s199 = sshll.u32 [#allocation5], 4
          %s200 = int_to_ptr.vmem [resolvable:$true] %s199
          %205 = dma.hbm_to_vmem [thread:$0]  %s198, 768, %s200, [#allocation6], 64, 64, 4
        $region16: #{tpu_custom_call.1} parent=11 // pred_fallthru
          _
        // Predicated region
        $region17: #{tpu_custom_call.1} parent=11 // pred_check
          %p206 = pneg %p88
        $region18: #{tpu_custom_call.1} parent=11 // pred_check_branch
          %208 = sbr.rel (%p206) target = $region20
        $region19: #{tpu_custom_call.1} parent=11 // pred_region
          %210 = vsyncadd [#allocation6], 0
          %s211 = sshll.u32 %s2, 4
          %s212 = int_to_ptr.hbm [resolvable:$true] %s211
          %s213 = sshll.u32 [#allocation7], 4
          %s214 = int_to_ptr.vmem [resolvable:$true] %s213
          %219 = dma.hbm_to_vmem [thread:$0]  %s212, 48, %s214, [#allocation6], 16, 16, 1
        $region20: #{tpu_custom_call.1} parent=11 // pred_fallthru
          _
        // Predicated region
        $region21: #{tpu_custom_call.1} parent=11 // pred_check
          %p220 = pneg %p109
        $region22: #{tpu_custom_call.1} parent=11 // pred_check_branch
          %222 = sbr.rel (%p220) target = $region24
        $region23: #{tpu_custom_call.1} parent=11 // pred_region
          %224 = vsyncadd [#allocation9], 0
          %s225 = sshll.u32 %s3, 4
          %s226 = int_to_ptr.hbm [resolvable:$true] %s225
          %s227 = sshll.u32 [#allocation8], 4
          %s228 = int_to_ptr.vmem [resolvable:$true] %s227
          %233 = dma.hbm_to_vmem [thread:$0]  %s226, 256, %s228, [#allocation9], 64, 64, 4
        $region24: #{tpu_custom_call.1} parent=11 // pred_fallthru
          _
        // Predicated region
        $region25: #{tpu_custom_call.1} parent=11 // pred_check
          %p234 = pneg %p130
        $region26: #{tpu_custom_call.1} parent=11 // pred_check_branch
          %236 = sbr.rel (%p234) target = $region28
        $region27: #{tpu_custom_call.1} parent=11 // pred_region
          _
        $region28: #{tpu_custom_call.1} parent=11 // pred_fallthru
          _
        // Predicated region
        $region29: #{tpu_custom_call.1} parent=11 // pred_check
          %p237 = pneg %p151
        $region30: #{tpu_custom_call.1} parent=11 // pred_check_branch
          %239 = sbr.rel (%p237) target = $region32
        $region31: #{tpu_custom_call.1} parent=11 // pred_region
          %241 = vsyncadd [#allocation9], 0
          %s242 = sshll.u32 %s5, 4
          %s243 = int_to_ptr.hbm [resolvable:$true] %s242
          %s244 = sshll.u32 [#allocation10], 4
          %s245 = int_to_ptr.vmem [resolvable:$true] %s244
          %250 = dma.hbm_to_vmem [thread:$0]  %s243, 256, %s245, [#allocation9], 64, 64, 4
        $region32: #{tpu_custom_call.1} parent=11 // pred_fallthru
          _
      $region12: #{tpu_custom_call.1} parent=5 // pred_fallthru
        _
      %p251 = scmp.lt.s32.totalorder %s20, 2
      // Predicated region
      $region33: #{tpu_custom_call.1} parent=5 // pred_check
        %p252 = pneg %p251
      $region34: #{tpu_custom_call.1} parent=5 // pred_check_branch
        %254 = sbr.rel (%p252) target = $region36
      $region35: #{tpu_custom_call.1} parent=5 // pred_region
        // Predicated region
        $region37: #{tpu_custom_call.1} parent=35 // pred_check
          %p255 = pneg %p40
        $region38: #{tpu_custom_call.1} parent=35 // pred_check_branch
          %257 = sbr.rel (%p255) target = $region40
        $region39: #{tpu_custom_call.1} parent=35 // pred_region
          %s258 = sand.u32 %s30, 1
          %s259 = scalar_lea.sflag [#allocation3], %s258
          %s260 = sand.u32 %s30, 1
          %s261 = smul.addr %s260, 8
          %s262 = scalar_lea.vmem [#allocation2], %s261
          %264 = vsyncadd %s259, 0
          %s265 = smul.addr %s20, 8
          %s266 = scalar_lea.hbm %s0, %s265
          %s268 = sshll.u32 %s266, 4
          %s269 = int_to_ptr.hbm [resolvable:$true] %s268
          %s270 = sshll.u32 %s262, 4
          %s271 = int_to_ptr.vmem [resolvable:$true] %s270
          %273 = dma.hbm_to_vmem [thread:$0]  %s269, 128, %s271, %s259
        $region40: #{tpu_custom_call.1} parent=35 // pred_fallthru
          _
      $region36: #{tpu_custom_call.1} parent=5 // pred_fallthru
        _
      %p274 = scmp.le.s32.totalorder 1, %s20
      %p275 = scmp.lt.s32.totalorder %s20, 3
      %p276 = pnand %p274, %p275
      %p277 = pneg %p276
      // Predicated region
      $region41: #{tpu_custom_call.1} parent=5 // pred_check
        _
      $region42: #{tpu_custom_call.1} parent=5 // pred_check_branch
        %279 = sbr.rel (%p276) target = $region44
      $region43: #{tpu_custom_call.1} parent=5 // pred_region
        %s280 = ssub.s32 %s20, 1
        %s281 = sand.u32 %s33, 1
        %s282 = scalar_lea.sflag [#allocation3], %s281
        %s283 = sand.u32 %s33, 1
        %s284 = smul.addr %s283, 8
        %s285 = scalar_lea.vmem [#allocation2], %s284
        // Predicated region
        $region45: #{tpu_custom_call.1} parent=43 // pred_check
          %p286 = pneg %p46
        $region46: #{tpu_custom_call.1} parent=43 // pred_check_branch
          %288 = sbr.rel (%p286) target = $region48
        $region47: #{tpu_custom_call.1} parent=43 // pred_region
          %290 = dma.done %s282, 128
        $region48: #{tpu_custom_call.1} parent=43 // pred_fallthru
          _
        // Predicated region
        $region49: #{tpu_custom_call.1} parent=43 // pred_check
          %p291 = pneg %p67
        $region50: #{tpu_custom_call.1} parent=43 // pred_check_branch
          %293 = sbr.rel (%p291) target = $region52
        $region51: #{tpu_custom_call.1} parent=43 // pred_region
          %295 = dma.done [#allocation6], 768
        $region52: #{tpu_custom_call.1} parent=43 // pred_fallthru
          _
        // Predicated region
        $region53: #{tpu_custom_call.1} parent=43 // pred_check
          %p296 = pneg %p88
        $region54: #{tpu_custom_call.1} parent=43 // pred_check_branch
          %298 = sbr.rel (%p296) target = $region56
        $region55: #{tpu_custom_call.1} parent=43 // pred_region
          %300 = dma.done [#allocation6], 48
        $region56: #{tpu_custom_call.1} parent=43 // pred_fallthru
          _
        // Predicated region
        $region57: #{tpu_custom_call.1} parent=43 // pred_check
          %p301 = pneg %p109
        $region58: #{tpu_custom_call.1} parent=43 // pred_check_branch
          %303 = sbr.rel (%p301) target = $region60
        $region59: #{tpu_custom_call.1} parent=43 // pred_region
          %305 = dma.done [#allocation9], 256
        $region60: #{tpu_custom_call.1} parent=43 // pred_fallthru
          _
        // Predicated region
        $region61: #{tpu_custom_call.1} parent=43 // pred_check
          %p306 = pneg %p151
        $region62: #{tpu_custom_call.1} parent=43 // pred_check_branch
          %308 = sbr.rel (%p306) target = $region64
        $region63: #{tpu_custom_call.1} parent=43 // pred_region
          %310 = dma.done [#allocation9], 256
        $region64: #{tpu_custom_call.1} parent=43 // pred_fallthru
          _
        %s311 = sand.u32 %s33, 1
        %s312 = scalar_lea.sflag [#allocation3], %s311
        %s313 = sand.u32 %s33, 1
        %s314 = smul.addr %s313, 8
        %s315 = scalar_lea.vmem [#allocation2], %s314
        %p316 = pneg %p46
        %p317 = pneg %p43
        %p318 = pneg %p67
        %p319 = pneg %p64
        %p320 = pneg %p88
        %p321 = pneg %p85
        %p322 = pneg %p109
        %p323 = pneg %p106
        %p324 = pneg %p130
        %p325 = pneg %p127
        %p326 = pneg %p151
        %p327 = pneg %p148
        %p328 = pneg %p177
        %p329 = pneg %p174
        %s330 = sand.u32 %s164, 1
        %s331 = scalar_lea.sflag [#allocation4], %s330
        %s332 = sand.u32 %s164, 1
        %s333 = smul.addr %s332, 8
        %s334 = scalar_lea.vmem [#allocation11], %s333
        %v336 = vld [vmem:[%s285] sm:$0xff]
        %v337 = vpack.c.bf16 %v336, %v336
        %v338 = vld [vmem:[#allocation5] sm:$0xf]
        %v339 = vld [vmem:[#allocation5 + $0x4] sm:$0xf]
        %v340 = vld [vmem:[#allocation5 + $0x8] sm:$0xf]
        %v341 = vld [vmem:[#allocation5 + $0xc] sm:$0xf]
        %v342 = vld [vmem:[#allocation7] sm:$0x1]
        %v344 = vperm.slane %v342, 0
        %v350 = vunpack.c.l.b16 %v338
        %v351 = vunpack.c.l.b16 %v339
        %v352 = vunpack.c.l.b16 %v340
        %v353 = vunpack.c.l.b16 %v341
        %v354 = vpack.c.b16 %v351, %v350
        %v355 = vpack.c.b16 %v353, %v352
        %vm358 = vcmask 261120
        %v360 = vsel %vm358, %v337, 0
        %362 = vmatpush.bf16.msra.mxu0 0
        %363 = vmatpush.bf16.msra.mxu0 0
        %364 = vmatpush.bf16.msra.mxu0 0
        %365 = vmatpush.bf16.msra.mxu0 0
        %366 = vmatpush.bf16.msra.mxu0 0
        %367 = vmatpush.bf16.msra.mxu0 0
        %368 = vmatpush.bf16.msra.mxu0 %v355
        %369 = vmatpush.bf16.msra.mxu0 %v354
        %370 = vmatmul.bf16.gmra.mxu0 %v360
        %v371 = vpop.f32.mrf.mxu0
        %v372 = vadd.f32 %v344, %v371
        %v373 = vpop.f32.mrf.mxu0
        %374 = vdwg.mxu0
        %v375 = vpack.c.bf16 %v372, %v372
        %377 = vrot.lane.b32.xlu0 %v375, 120
        %v378 = vpop.permute.xlu0 %377
        %379 = vrot.lane.b32.xlu0 %v375, 112
        %v380 = vpop.permute.xlu0 %379
        %381 = vrot.lane.b32.xlu0 %v375, 104
        %v382 = vpop.permute.xlu0 %381
        %v385 = vpack.i.b16 %v378, %v375
        %v386 = vshrl.u32 %v375, 16
        %v387 = vshrl.u32 %v378, 16
        %v388 = vpack.i.b16 %v387, %v386
        %v391 = vpack.i.b16 %v382, %v380
        %v392 = vshrl.u32 %v380, 16
        %v393 = vshrl.u32 %v382, 16
        %v394 = vpack.i.b16 %v393, %v392
        %v397 = vunpack.c.l.s4 1983009808
        %v398 = vunpack.c.0.s8 %v397
        %v399 = vperm.slane %v385, %v398
        %v402 = vunpack.c.l.s4 1983009808
        %v403 = vunpack.c.0.s8 %v402
        %v404 = vperm.slane %v391, %v403
        %v405 = vrot.slane %v404, 4
        %vm406 = vcmask 1047556
        %v407 = vsel %vm406, %v405, %v399
        %v408 = vrot.slane %v399, 4
        %v409 = vsel %vm406, %v404, %v408
        %v411 = vunpack.c.l.s4 1934713408
        %v412 = vunpack.c.0.s8 %v411
        %v413 = vperm.slane %v407, %v412
        %v415 = vunpack.c.l.s4 1934713408
        %v416 = vunpack.c.0.s8 %v415
        %v417 = vperm.slane %v409, %v416
        %v418 = vrot.slane %v413, 4
        %v419 = vsel %vm406, 0, %v418
        %v420 = vrot.slane %v417, 4
        %v421 = vsel %vm406, 0, %v420
        %v424 = vunpack.c.l.s4 1983009808
        %v425 = vunpack.c.0.s8 %v424
        %v426 = vperm.slane %v388, %v425
        %v429 = vunpack.c.l.s4 1983009808
        %v430 = vunpack.c.0.s8 %v429
        %v431 = vperm.slane %v394, %v430
        %v432 = vrot.slane %v431, 4
        %v433 = vsel %vm406, %v432, %v426
        %v434 = vrot.slane %v426, 4
        %v435 = vsel %vm406, %v431, %v434
        %v437 = vunpack.c.l.s4 1934713408
        %v438 = vunpack.c.0.s8 %v437
        %v439 = vperm.slane %v433, %v438
        %v441 = vunpack.c.l.s4 1934713408
        %v442 = vunpack.c.0.s8 %v441
        %v443 = vperm.slane %v435, %v442
        %v444 = vrot.slane %v439, 4
        %v445 = vsel %vm406, 0, %v444
        %v446 = vrot.slane %v443, 4
        %v447 = vsel %vm406, 0, %v446
        %v448 = vsel %vm406, %v420, %v413
        %v450 = vunpack.c.l.s4 1983009808
        %v451 = vunpack.c.0.s8 %v450
        %v452 = vperm.slane %v448, %v451
        %v453 = vrot.slane %v421, 4
        %v454 = vsel %vm406, %v453, %v419
        %v456 = vunpack.c.l.s4 1983009808
        %v457 = vunpack.c.0.s8 %v456
        %v458 = vperm.slane %v454, %v457
        %v459 = vrot.slane %v458, 4
        %v460 = vsel %vm406, %v459, %v452
        %v462 = vunpack.c.l.s4 1934713408
        %v463 = vunpack.c.0.s8 %v462
        %v464 = vperm.slane %v460, %v463
        %v465 = vrot.slane %v464, 4
        %v466 = vsel %vm406, 0, %v465
        %v467 = vsel %vm406, %v446, %v439
        %v469 = vunpack.c.l.s4 1983009808
        %v470 = vunpack.c.0.s8 %v469
        %v471 = vperm.slane %v467, %v470
        %v472 = vrot.slane %v447, 4
        %v473 = vsel %vm406, %v472, %v445
        %v475 = vunpack.c.l.s4 1983009808
        %v476 = vunpack.c.0.s8 %v475
        %v477 = vperm.slane %v473, %v476
        %v478 = vrot.slane %v477, 4
        %v479 = vsel %vm406, %v478, %v471
        %v481 = vunpack.c.l.s4 1934713408
        %v482 = vunpack.c.0.s8 %v481
        %v483 = vperm.slane %v479, %v482
        %v484 = vrot.slane %v483, 4
        %v485 = vsel %vm406, 0, %v484
        %v488 = vpack.i.b16 %v483, %v464
        %v489 = vshrl.u32 %v464, 16
        %v490 = vshrl.u32 %v483, 16
        %v491 = vpack.i.b16 %v490, %v489
        %v494 = vpack.i.b16 %v485, %v466
        %v495 = vshrl.u32 %v466, 16
        %v496 = vshrl.u32 %v485, 16
        %v497 = vpack.i.b16 %v496, %v495
        %s498 = scalar_lea.vmem [#allocation5], 16
        %v499 = vld [vmem:[%s498] sm:$0xf]
        %v500 = vld [vmem:[%s498 + $0x4] sm:$0xf]
        %v501 = vld [vmem:[%s498 + $0x8] sm:$0xf]
        %v502 = vld [vmem:[%s498 + $0xc] sm:$0xf]
        %s503 = scalar_lea.vmem [#allocation7], 1
        %v504 = vld [vmem:[%s503] sm:$0x1]
        %v506 = vperm.slane %v504, 0
        %v512 = vunpack.c.l.b16 %v499
        %v513 = vunpack.c.l.b16 %v500
        %v514 = vunpack.c.l.b16 %v501
        %v515 = vunpack.c.l.b16 %v502
        %v516 = vpack.c.b16 %v513, %v512
        %v517 = vpack.c.b16 %v515, %v514
        %520 = vmatpush.bf16.msra.mxu0 0
        %521 = vmatpush.bf16.msra.mxu0 0
        %522 = vmatpush.bf16.msra.mxu0 0
        %523 = vmatpush.bf16.msra.mxu0 0
        %524 = vmatpush.bf16.msra.mxu0 0
        %525 = vmatpush.bf16.msra.mxu0 0
        %526 = vmatpush.bf16.msra.mxu0 %v517
        %527 = vmatpush.bf16.msra.mxu0 %v516
        %528 = vmatmul.bf16.gmra.mxu0 %v360
        %v529 = vpop.f32.mrf.mxu0
        %v530 = vadd.f32 %v506, %v529
        %v531 = vpop.f32.mrf.mxu0
        %532 = vdwg.mxu0
        %v533 = vpack.c.bf16 %v530, %v530
        %535 = vrot.lane.b32.xlu0 %v533, 120
        %v536 = vpop.permute.xlu0 %535
        %537 = vrot.lane.b32.xlu0 %v533, 112
        %v538 = vpop.permute.xlu0 %537
        %539 = vrot.lane.b32.xlu0 %v533, 104
        %v540 = vpop.permute.xlu0 %539
        %v543 = vpack.i.b16 %v536, %v533
        %v544 = vshrl.u32 %v533, 16
        %v545 = vshrl.u32 %v536, 16
        %v546 = vpack.i.b16 %v545, %v544
        %v549 = vpack.i.b16 %v540, %v538
        %v550 = vshrl.u32 %v538, 16
        %v551 = vshrl.u32 %v540, 16
        %v552 = vpack.i.b16 %v551, %v550
        %v555 = vunpack.c.l.s4 1983009808
        %v556 = vunpack.c.0.s8 %v555
        %v557 = vperm.slane %v543, %v556
        %v560 = vunpack.c.l.s4 1983009808
        %v561 = vunpack.c.0.s8 %v560
        %v562 = vperm.slane %v549, %v561
        %v563 = vrot.slane %v562, 4
        %v564 = vsel %vm406, %v563, %v557
        %v565 = vrot.slane %v557, 4
        %v566 = vsel %vm406, %v562, %v565
        %v568 = vunpack.c.l.s4 1934713408
        %v569 = vunpack.c.0.s8 %v568
        %v570 = vperm.slane %v564, %v569
        %v572 = vunpack.c.l.s4 1934713408
        %v573 = vunpack.c.0.s8 %v572
        %v574 = vperm.slane %v566, %v573
        %v575 = vrot.slane %v570, 4
        %v576 = vsel %vm406, 0, %v575
        %v577 = vrot.slane %v574, 4
        %v578 = vsel %vm406, 0, %v577
        %v581 = vunpack.c.l.s4 1983009808
        %v582 = vunpack.c.0.s8 %v581
        %v583 = vperm.slane %v546, %v582
        %v586 = vunpack.c.l.s4 1983009808
        %v587 = vunpack.c.0.s8 %v586
        %v588 = vperm.slane %v552, %v587
        %v589 = vrot.slane %v588, 4
        %v590 = vsel %vm406, %v589, %v583
        %v591 = vrot.slane %v583, 4
        %v592 = vsel %vm406, %v588, %v591
        %v594 = vunpack.c.l.s4 1934713408
        %v595 = vunpack.c.0.s8 %v594
        %v596 = vperm.slane %v590, %v595
        %v598 = vunpack.c.l.s4 1934713408
        %v599 = vunpack.c.0.s8 %v598
        %v600 = vperm.slane %v592, %v599
        %v601 = vrot.slane %v596, 4
        %v602 = vsel %vm406, 0, %v601
        %v603 = vrot.slane %v600, 4
        %v604 = vsel %vm406, 0, %v603
        %v605 = vsel %vm406, %v577, %v570
        %v607 = vunpack.c.l.s4 1983009808
        %v608 = vunpack.c.0.s8 %v607
        %v609 = vperm.slane %v605, %v608
        %v610 = vrot.slane %v578, 4
        %v611 = vsel %vm406, %v610, %v576
        %v613 = vunpack.c.l.s4 1983009808
        %v614 = vunpack.c.0.s8 %v613
        %v615 = vperm.slane %v611, %v614
        %v616 = vrot.slane %v615, 4
        %v617 = vsel %vm406, %v616, %v609
        %v619 = vunpack.c.l.s4 1934713408
        %v620 = vunpack.c.0.s8 %v619
        %v621 = vperm.slane %v617, %v620
        %v622 = vrot.slane %v621, 4
        %v623 = vsel %vm406, 0, %v622
        %v624 = vsel %vm406, %v603, %v596
        %v626 = vunpack.c.l.s4 1983009808
        %v627 = vunpack.c.0.s8 %v626
        %v628 = vperm.slane %v624, %v627
        %v629 = vrot.slane %v604, 4
        %v630 = vsel %vm406, %v629, %v602
        %v632 = vunpack.c.l.s4 1983009808
        %v633 = vunpack.c.0.s8 %v632
        %v634 = vperm.slane %v630, %v633
        %v635 = vrot.slane %v634, 4
        %v636 = vsel %vm406, %v635, %v628
        %v638 = vunpack.c.l.s4 1934713408
        %v639 = vunpack.c.0.s8 %v638
        %v640 = vperm.slane %v636, %v639
        %v641 = vrot.slane %v640, 4
        %v642 = vsel %vm406, 0, %v641
        %v645 = vpack.i.b16 %v640, %v621
        %v646 = vshrl.u32 %v621, 16
        %v647 = vshrl.u32 %v640, 16
        %v648 = vpack.i.b16 %v647, %v646
        %v651 = vpack.i.b16 %v642, %v623
        %v652 = vshrl.u32 %v623, 16
        %v653 = vshrl.u32 %v642, 16
        %v654 = vpack.i.b16 %v653, %v652
        %s655 = scalar_lea.vmem [#allocation5], 32
        %v656 = vld [vmem:[%s655] sm:$0xf]
        %v657 = vld [vmem:[%s655 + $0x4] sm:$0xf]
        %v658 = vld [vmem:[%s655 + $0x8] sm:$0xf]
        %v659 = vld [vmem:[%s655 + $0xc] sm:$0xf]
        %s660 = scalar_lea.vmem [#allocation7], 2
        %v661 = vld [vmem:[%s660] sm:$0x1]
        %v663 = vperm.slane %v661, 0
        %v669 = vunpack.c.l.b16 %v656
        %v670 = vunpack.c.l.b16 %v657
        %v671 = vunpack.c.l.b16 %v658
        %v672 = vunpack.c.l.b16 %v659
        %v673 = vpack.c.b16 %v670, %v669
        %v674 = vpack.c.b16 %v672, %v671
        %677 = vmatpush.bf16.msra.mxu0 0
        %678 = vmatpush.bf16.msra.mxu0 0
        %679 = vmatpush.bf16.msra.mxu0 0
        %680 = vmatpush.bf16.msra.mxu0 0
        %681 = vmatpush.bf16.msra.mxu0 0
        %682 = vmatpush.bf16.msra.mxu0 0
        %683 = vmatpush.bf16.msra.mxu0 %v674
        %684 = vmatpush.bf16.msra.mxu0 %v673
        %685 = vmatmul.bf16.gmra.mxu0 %v360
        %v686 = vpop.f32.mrf.mxu0
        %v687 = vadd.f32 %v663, %v686
        %v688 = vpop.f32.mrf.mxu0
        %689 = vdwg.mxu0
        %v690 = vpack.c.bf16 %v687, %v687
        %692 = vrot.lane.b32.xlu0 %v690, 120
        %v693 = vpop.permute.xlu0 %692
        %694 = vrot.lane.b32.xlu0 %v690, 112
        %v695 = vpop.permute.xlu0 %694
        %696 = vrot.lane.b32.xlu0 %v690, 104
        %v697 = vpop.permute.xlu0 %696
        %v700 = vpack.i.b16 %v693, %v690
        %v701 = vshrl.u32 %v690, 16
        %v702 = vshrl.u32 %v693, 16
        %v703 = vpack.i.b16 %v702, %v701
        %v706 = vpack.i.b16 %v697, %v695
        %v707 = vshrl.u32 %v695, 16
        %v708 = vshrl.u32 %v697, 16
        %v709 = vpack.i.b16 %v708, %v707
        %v712 = vunpack.c.l.s4 1983009808
        %v713 = vunpack.c.0.s8 %v712
        %v714 = vperm.slane %v700, %v713
        %v717 = vunpack.c.l.s4 1983009808
        %v718 = vunpack.c.0.s8 %v717
        %v719 = vperm.slane %v706, %v718
        %v720 = vrot.slane %v719, 4
        %v721 = vsel %vm406, %v720, %v714
        %v722 = vrot.slane %v714, 4
        %v723 = vsel %vm406, %v719, %v722
        %v725 = vunpack.c.l.s4 1934713408
        %v726 = vunpack.c.0.s8 %v725
        %v727 = vperm.slane %v721, %v726
        %v729 = vunpack.c.l.s4 1934713408
        %v730 = vunpack.c.0.s8 %v729
        %v731 = vperm.slane %v723, %v730
        %v732 = vrot.slane %v727, 4
        %v733 = vsel %vm406, 0, %v732
        %v734 = vrot.slane %v731, 4
        %v735 = vsel %vm406, 0, %v734
        %v738 = vunpack.c.l.s4 1983009808
        %v739 = vunpack.c.0.s8 %v738
        %v740 = vperm.slane %v703, %v739
        %v743 = vunpack.c.l.s4 1983009808
        %v744 = vunpack.c.0.s8 %v743
        %v745 = vperm.slane %v709, %v744
        %v746 = vrot.slane %v745, 4
        %v747 = vsel %vm406, %v746, %v740
        %v748 = vrot.slane %v740, 4
        %v749 = vsel %vm406, %v745, %v748
        %v751 = vunpack.c.l.s4 1934713408
        %v752 = vunpack.c.0.s8 %v751
        %v753 = vperm.slane %v747, %v752
        %v755 = vunpack.c.l.s4 1934713408
        %v756 = vunpack.c.0.s8 %v755
        %v757 = vperm.slane %v749, %v756
        %v758 = vrot.slane %v753, 4
        %v759 = vsel %vm406, 0, %v758
        %v760 = vrot.slane %v757, 4
        %v761 = vsel %vm406, 0, %v760
        %v762 = vsel %vm406, %v734, %v727
        %v764 = vunpack.c.l.s4 1983009808
        %v765 = vunpack.c.0.s8 %v764
        %v766 = vperm.slane %v762, %v765
        %v767 = vrot.slane %v735, 4
        %v768 = vsel %vm406, %v767, %v733
        %v770 = vunpack.c.l.s4 1983009808
        %v771 = vunpack.c.0.s8 %v770
        %v772 = vperm.slane %v768, %v771
        %v773 = vrot.slane %v772, 4
        %v774 = vsel %vm406, %v773, %v766
        %v776 = vunpack.c.l.s4 1934713408
        %v777 = vunpack.c.0.s8 %v776
        %v778 = vperm.slane %v774, %v777
        %v779 = vrot.slane %v778, 4
        %v780 = vsel %vm406, 0, %v779
        %v781 = vsel %vm406, %v760, %v753
        %v783 = vunpack.c.l.s4 1983009808
        %v784 = vunpack.c.0.s8 %v783
        %v785 = vperm.slane %v781, %v784
        %v786 = vrot.slane %v761, 4
        %v787 = vsel %vm406, %v786, %v759
        %v789 = vunpack.c.l.s4 1983009808
        %v790 = vunpack.c.0.s8 %v789
        %v791 = vperm.slane %v787, %v790
        %v792 = vrot.slane %v791, 4
        %v793 = vsel %vm406, %v792, %v785
        %v795 = vunpack.c.l.s4 1934713408
        %v796 = vunpack.c.0.s8 %v795
        %v797 = vperm.slane %v793, %v796
        %v798 = vrot.slane %v797, 4
        %v799 = vsel %vm406, 0, %v798
        %v802 = vpack.i.b16 %v797, %v778
        %v803 = vshrl.u32 %v778, 16
        %v804 = vshrl.u32 %v797, 16
        %v805 = vpack.i.b16 %v804, %v803
        %v808 = vpack.i.b16 %v799, %v780
        %v809 = vshrl.u32 %v780, 16
        %v810 = vshrl.u32 %v799, 16
        %v811 = vpack.i.b16 %v810, %v809
        %vm812 = vcmask 64512
        %v814 = vsel %vm812, %v488, 0
        %v817 = vsel %vm812, %v645, 0
        %819 = vmatpush.bf16.xpose.msra.mxu0 0
        %820 = vmatpush.bf16.xpose.msra.mxu0 0
        %821 = vmatpush.bf16.xpose.msra.mxu0 0
        %822 = vmatpush.bf16.xpose.msra.mxu0 0
        %823 = vmatpush.bf16.xpose.msra.mxu0 0
        %824 = vmatpush.bf16.xpose.msra.mxu0 0
        %825 = vmatpush.bf16.xpose.msra.mxu0 0
        %826 = vmatpush.bf16.xpose.msra.mxu0 %v817
        %827 = vmatmul.bf16.gmra.mxu0 %v814
        %v828 = vpop.f32.mrf.mxu0
        %v829 = vadd.f32 0.0, %v828
        %v830 = vpop.f32.mrf.mxu0
        %831 = vdwg.mxu0
        %v833 = vsel %vm812, %v491, 0
        %v836 = vsel %vm812, %v648, 0
        %838 = vmatpush.bf16.xpose.msra.mxu0 0
        %839 = vmatpush.bf16.xpose.msra.mxu0 0
        %840 = vmatpush.bf16.xpose.msra.mxu0 0
        %841 = vmatpush.bf16.xpose.msra.mxu0 0
        %842 = vmatpush.bf16.xpose.msra.mxu0 0
        %843 = vmatpush.bf16.xpose.msra.mxu0 0
        %844 = vmatpush.bf16.xpose.msra.mxu0 0
        %845 = vmatpush.bf16.xpose.msra.mxu0 %v836
        %846 = vmatmul.bf16.gmra.mxu0 %v833
        %v847 = vpop.f32.mrf.mxu0
        %v848 = vadd.f32 0.0, %v847
        %v849 = vpop.f32.mrf.mxu0
        %850 = vdwg.mxu0
        %v852 = vsel %vm812, %v494, 0
        %v855 = vsel %vm812, %v651, 0
        %857 = vmatpush.bf16.xpose.msra.mxu0 0
        %858 = vmatpush.bf16.xpose.msra.mxu0 0
        %859 = vmatpush.bf16.xpose.msra.mxu0 0
        %860 = vmatpush.bf16.xpose.msra.mxu0 0
        %861 = vmatpush.bf16.xpose.msra.mxu0 0
        %862 = vmatpush.bf16.xpose.msra.mxu0 0
        %863 = vmatpush.bf16.xpose.msra.mxu0 0
        %864 = vmatpush.bf16.xpose.msra.mxu0 %v855
        %865 = vmatmul.bf16.gmra.mxu0 %v852
        %v866 = vpop.f32.mrf.mxu0
        %v867 = vadd.f32 0.0, %v866
        %v868 = vpop.f32.mrf.mxu0
        %869 = vdwg.mxu0
        %v871 = vsel %vm812, %v497, 0
        %v874 = vsel %vm812, %v654, 0
        %876 = vmatpush.bf16.xpose.msra.mxu0 0
        %877 = vmatpush.bf16.xpose.msra.mxu0 0
        %878 = vmatpush.bf16.xpose.msra.mxu0 0
        %879 = vmatpush.bf16.xpose.msra.mxu0 0
        %880 = vmatpush.bf16.xpose.msra.mxu0 0
        %881 = vmatpush.bf16.xpose.msra.mxu0 0
        %882 = vmatpush.bf16.xpose.msra.mxu0 0
        %883 = vmatpush.bf16.xpose.msra.mxu0 %v874
        %884 = vmatmul.bf16.gmra.mxu0 %v871
        %v885 = vpop.f32.mrf.mxu0
        %v886 = vadd.f32 0.0, %v885
        %v887 = vpop.f32.mrf.mxu0
        %888 = vdwg.mxu0
        %v889 = vsel %vm812, %v829, -inf
        %890 = vmax.xlane.f32.xlu0 %v889
        %v891 = vpop.xlane.xlu0 %890
        %v892 = vsel %vm812, %v848, -inf
        %893 = vmax.xlane.f32.xlu0 %v892
        %v894 = vpop.xlane.xlu0 %893
        %v895 = vsel %vm812, %v867, -inf
        %896 = vmax.xlane.f32.xlu0 %v895
        %v897 = vpop.xlane.xlu0 %896
        %v898 = vsel %vm812, %v886, -inf
        %899 = vmax.xlane.f32.xlu0 %v898
        %v900 = vpop.xlane.xlu0 %899
        %v901 = vsub.f32 %v829, %v891
        %v902 = vsub.f32 %v848, %v894
        %v903 = vsub.f32 %v867, %v897
        %v904 = vsub.f32 %v886, %v900
        %v905 = vmul.f32 %v901, 1.442695
        %v906 = vpow.pop %v905
        %v907 = vmul.f32 %v902, 1.442695
        %v908 = vpow.pop %v907
        %v909 = vmul.f32 %v903, 1.442695
        %v910 = vpow.pop %v909
        %v911 = vmul.f32 %v904, 1.442695
        %v912 = vpow.pop %v911
        %v913 = vsel %vm812, %v906, 0.0
        %914 = vadd.xlane.f32.xlu0 %v913
        %v915 = vpop.xlane.xlu0 %914
        %v916 = vsel %vm812, %v908, 0.0
        %917 = vadd.xlane.f32.xlu0 %v916
        %v918 = vpop.xlane.xlu0 %917
        %v919 = vsel %vm812, %v910, 0.0
        %920 = vadd.xlane.f32.xlu0 %v919
        %v921 = vpop.xlane.xlu0 %920
        %v922 = vsel %vm812, %v912, 0.0
        %923 = vadd.xlane.f32.xlu0 %v922
        %v924 = vpop.xlane.xlu0 %923
        %v925 = vrcp.pop %v915
        %v926 = vrcp.pop %v918
        %v927 = vrcp.pop %v921
        %v928 = vrcp.pop %v924
        %v929 = vpack.c.bf16 %v906, %v906
        %v930 = vpack.c.bf16 %v908, %v908
        %v931 = vpack.c.bf16 %v910, %v910
        %v932 = vpack.c.bf16 %v912, %v912
        %v934 = vsel %vm812, %v929, 0
        %vm936 = vcmask 1043456
        %v938 = vsel %vm936, %v802, 0
        %940 = vmatpush.bf16.msra.mxu0 0
        %941 = vmatpush.bf16.msra.mxu0 0
        %942 = vmatpush.bf16.msra.mxu0 0
        %943 = vmatpush.bf16.msra.mxu0 0
        %944 = vmatpush.bf16.msra.mxu0 0
        %945 = vmatpush.bf16.msra.mxu0 0
        %946 = vmatpush.bf16.msra.mxu0 0
        %947 = vmatpush.bf16.msra.mxu0 %v938
        %948 = vmatmul.bf16.gmra.mxu0 %v934
        %v949 = vpop.f32.mrf.mxu0
        %v950 = vadd.f32 0.0, %v949
        %v951 = vpop.f32.mrf.mxu0
        %952 = vdwg.mxu0
        %v954 = vsel %vm812, %v930, 0
        %v957 = vsel %vm936, %v805, 0
        %959 = vmatpush.bf16.msra.mxu0 0
        %960 = vmatpush.bf16.msra.mxu0 0
        %961 = vmatpush.bf16.msra.mxu0 0
        %962 = vmatpush.bf16.msra.mxu0 0
        %963 = vmatpush.bf16.msra.mxu0 0
        %964 = vmatpush.bf16.msra.mxu0 0
        %965 = vmatpush.bf16.msra.mxu0 0
        %966 = vmatpush.bf16.msra.mxu0 %v957
        %967 = vmatmul.bf16.gmra.mxu0 %v954
        %v968 = vpop.f32.mrf.mxu0
        %v969 = vadd.f32 0.0, %v968
        %v970 = vpop.f32.mrf.mxu0
        %971 = vdwg.mxu0
        %v973 = vsel %vm812, %v931, 0
        %v976 = vsel %vm936, %v808, 0
        %978 = vmatpush.bf16.msra.mxu0 0
        %979 = vmatpush.bf16.msra.mxu0 0
        %980 = vmatpush.bf16.msra.mxu0 0
        %981 = vmatpush.bf16.msra.mxu0 0
        %982 = vmatpush.bf16.msra.mxu0 0
        %983 = vmatpush.bf16.msra.mxu0 0
        %984 = vmatpush.bf16.msra.mxu0 0
        %985 = vmatpush.bf16.msra.mxu0 %v976
        %986 = vmatmul.bf16.gmra.mxu0 %v973
        %v987 = vpop.f32.mrf.mxu0
        %v988 = vadd.f32 0.0, %v987
        %v989 = vpop.f32.mrf.mxu0
        %990 = vdwg.mxu0
        %v992 = vsel %vm812, %v932, 0
        %v995 = vsel %vm936, %v811, 0
        %997 = vmatpush.bf16.msra.mxu0 0
        %998 = vmatpush.bf16.msra.mxu0 0
        %999 = vmatpush.bf16.msra.mxu0 0
        %1000 = vmatpush.bf16.msra.mxu0 0
        %1001 = vmatpush.bf16.msra.mxu0 0
        %1002 = vmatpush.bf16.msra.mxu0 0
        %1003 = vmatpush.bf16.msra.mxu0 0
        %1004 = vmatpush.bf16.msra.mxu0 %v995
        %1005 = vmatmul.bf16.gmra.mxu0 %v992
        %v1006 = vpop.f32.mrf.mxu0
        %v1007 = vadd.f32 0.0, %v1006
        %v1008 = vpop.f32.mrf.mxu0
        %1009 = vdwg.mxu0
        %v1010 = vmul.f32 %v950, %v925
        %v1011 = vmul.f32 %v969, %v926
        %v1012 = vmul.f32 %v988, %v927
        %v1013 = vmul.f32 %v1007, %v928
        %v1014 = vpack.c.bf16 %v1010, %v1010
        %v1015 = vpack.c.bf16 %v1011, %v1011
        %v1016 = vpack.c.bf16 %v1012, %v1012
        %v1017 = vpack.c.bf16 %v1013, %v1013
        %v1018 = vld [vmem:[#allocation8] sm:$0xf]
        %v1019 = vld [vmem:[#allocation8 + $0x4] sm:$0xf]
        %v1020 = vld [vmem:[#allocation8 + $0x8] sm:$0xf]
        %v1021 = vld [vmem:[#allocation8 + $0xc] sm:$0xf]
        %v1023 = vsel %vm812, %v1014, 0
        %v1026 = vsel %vm936, %v1018, 0
        %1028 = vmatpush.bf16.msra.mxu0 0
        %1029 = vmatpush.bf16.msra.mxu0 0
        %1030 = vmatpush.bf16.msra.mxu0 0
        %1031 = vmatpush.bf16.msra.mxu0 0
        %1032 = vmatpush.bf16.msra.mxu0 0
        %1033 = vmatpush.bf16.msra.mxu0 0
        %1034 = vmatpush.bf16.msra.mxu0 0
        %1035 = vmatpush.bf16.msra.mxu0 %v1026
        %1036 = vmatmul.bf16.gmra.mxu0 %v1023
        %v1037 = vpop.f32.mrf.mxu0
        %v1038 = vadd.f32 0.0, %v1037
        %v1039 = vpop.f32.mrf.mxu0
        %1040 = vdwg.mxu0
        %v1042 = vsel %vm812, %v1015, 0
        %v1045 = vsel %vm936, %v1019, 0
        %1047 = vmatpush.bf16.msra.mxu0 0
        %1048 = vmatpush.bf16.msra.mxu0 0
        %1049 = vmatpush.bf16.msra.mxu0 0
        %1050 = vmatpush.bf16.msra.mxu0 0
        %1051 = vmatpush.bf16.msra.mxu0 0
        %1052 = vmatpush.bf16.msra.mxu0 0
        %1053 = vmatpush.bf16.msra.mxu0 0
        %1054 = vmatpush.bf16.msra.mxu0 %v1045
        %1055 = vmatmul.bf16.gmra.mxu0 %v1042
        %v1056 = vpop.f32.mrf.mxu0
        %v1057 = vadd.f32 0.0, %v1056
        %v1058 = vpop.f32.mrf.mxu0
        %1059 = vdwg.mxu0
        %v1061 = vsel %vm812, %v1016, 0
        %v1064 = vsel %vm936, %v1020, 0
        %1066 = vmatpush.bf16.msra.mxu0 0
        %1067 = vmatpush.bf16.msra.mxu0 0
        %1068 = vmatpush.bf16.msra.mxu0 0
        %1069 = vmatpush.bf16.msra.mxu0 0
        %1070 = vmatpush.bf16.msra.mxu0 0
        %1071 = vmatpush.bf16.msra.mxu0 0
        %1072 = vmatpush.bf16.msra.mxu0 0
        %1073 = vmatpush.bf16.msra.mxu0 %v1064
        %1074 = vmatmul.bf16.gmra.mxu0 %v1061
        %v1075 = vpop.f32.mrf.mxu0
        %v1076 = vadd.f32 0.0, %v1075
        %v1077 = vpop.f32.mrf.mxu0
        %1078 = vdwg.mxu0
        %v1080 = vsel %vm812, %v1017, 0
        %v1083 = vsel %vm936, %v1021, 0
        %1085 = vmatpush.bf16.msra.mxu0 0
        %1086 = vmatpush.bf16.msra.mxu0 0
        %1087 = vmatpush.bf16.msra.mxu0 0
        %1088 = vmatpush.bf16.msra.mxu0 0
        %1089 = vmatpush.bf16.msra.mxu0 0
        %1090 = vmatpush.bf16.msra.mxu0 0
        %1091 = vmatpush.bf16.msra.mxu0 0
        %1092 = vmatpush.bf16.msra.mxu0 %v1083
        %1093 = vmatmul.bf16.gmra.mxu0 %v1080
        %v1094 = vpop.f32.mrf.mxu0
        %v1095 = vadd.f32 0.0, %v1094
        %v1096 = vpop.f32.mrf.mxu0
        %1097 = vdwg.mxu0
        %v1098 = vsel %vm358, %v1038, 0.0
        %v1099 = vsel %vm358, %v1057, 0.0
        %v1100 = vadd.f32 %v1098, %v1099
        %v1101 = vsel %vm358, %v1076, 0.0
        %v1102 = vadd.f32 %v1100, %v1101
        %v1103 = vsel %vm358, %v1095, 0.0
        %v1104 = vadd.f32 %v1102, %v1103
        %v1105 = vld [vmem:[%s4] sm:$0x1]
        %v1107 = vperm.slane %v1105, 0
        %v1109 = vadd.f32 %v1104, %v1107
        %v1110 = vadd.f32 %v1109, %v336
        %v1111 = vpack.c.bf16 %v1110, %v1110
        %v1112 = vld [vmem:[#allocation10] sm:$0xf]
        %v1113 = vld [vmem:[#allocation10 + $0x4] sm:$0xf]
        %v1114 = vld [vmem:[#allocation10 + $0x8] sm:$0xf]
        %v1115 = vld [vmem:[#allocation10 + $0xc] sm:$0xf]
        %v1120 = vunpack.c.l.b16 %v1112
        %v1121 = vunpack.c.l.b16 %v1113
        %v1122 = vunpack.c.l.b16 %v1114
        %v1123 = vunpack.c.l.b16 %v1115
        %v1124 = vpack.c.b16 %v1121, %v1120
        %v1125 = vpack.c.b16 %v1123, %v1122
        %v1129 = vsel %vm358, %v1111, 0
        %1131 = vmatpush.bf16.msra.mxu0 0
        %1132 = vmatpush.bf16.msra.mxu0 0
        %1133 = vmatpush.bf16.msra.mxu0 0
        %1134 = vmatpush.bf16.msra.mxu0 0
        %1135 = vmatpush.bf16.msra.mxu0 0
        %1136 = vmatpush.bf16.msra.mxu0 0
        %1137 = vmatpush.bf16.msra.mxu0 %v1125
        %1138 = vmatpush.bf16.msra.mxu0 %v1124
        %1139 = vmatmul.bf16.gmra.mxu0 %v1129
        %v1140 = vpop.f32.mrf.mxu0
        %v1141 = vadd.f32 %v1110, %v1140
        %v1142 = vpop.f32.mrf.mxu0
        %1143 = vdwg.mxu0
        %1144 = vst.msk [vmem:[%s334] sm:$0xff] %vm358, %v1141
        %s1145 = sand.u32 %s164, 1
        %s1146 = scalar_lea.sflag [#allocation4], %s1145
        %s1147 = sand.u32 %s164, 1
        %s1148 = smul.addr %s1147, 8
        %s1149 = scalar_lea.vmem [#allocation11], %s1148
        // Predicated region
        $region65: #{tpu_custom_call.1} parent=43 // pred_check
          %p1150 = pneg %p174
        $region66: #{tpu_custom_call.1} parent=43 // pred_check_branch
          %1152 = sbr.rel (%p1150) target = $region68
        $region67: #{tpu_custom_call.1} parent=43 // pred_region
          %1154 = vsyncadd %s1146, 0
          %s1155 = smul.addr %s25, 8
          %s1156 = scalar_lea.hbm %s6, %s1155
          %s1158 = sshll.u32 %s1149, 4
          %s1159 = int_to_ptr.vmem [resolvable:$true] %s1158
          %s1160 = sshll.u32 %s1156, 4
          %s1161 = int_to_ptr.hbm [resolvable:$true] %s1160
          %1163 = dma.vmem_to_hbm [thread:$0]  %s1159, 128, %s1161, %s1146
        $region68: #{tpu_custom_call.1} parent=43 // pred_fallthru
          _
      $region44: #{tpu_custom_call.1} parent=5 // pred_fallthru
        _
      %p1164 = scmp.le.s32.totalorder 2, %s20
      // Predicated region
      $region69: #{tpu_custom_call.1} parent=5 // pred_check
        %p1165 = pneg %p1164
      $region70: #{tpu_custom_call.1} parent=5 // pred_check_branch
        %1167 = sbr.rel (%p1165) target = $region72
      $region71: #{tpu_custom_call.1} parent=5 // pred_region
        %s1168 = ssub.s32 %s20, 2
        // Predicated region
        $region73: #{tpu_custom_call.1} parent=71 // pred_check
          %p1169 = pneg %p180
        $region74: #{tpu_custom_call.1} parent=71 // pred_check_branch
          %1171 = sbr.rel (%p1169) target = $region76
        $region75: #{tpu_custom_call.1} parent=71 // pred_region
          %s1172 = sand.u32 %s165, 1
          %s1173 = scalar_lea.sflag [#allocation4], %s1172
          %s1174 = sand.u32 %s165, 1
          %s1175 = smul.addr %s1174, 8
          %s1176 = scalar_lea.vmem [#allocation11], %s1175
          %1178 = dma.done %s1173, 128
        $region76: #{tpu_custom_call.1} parent=71 // pred_fallthru
          _
      $region72: #{tpu_custom_call.1} parent=5 // pred_fallthru
        _
    $region6: #{tpu_custom_call.1} parent=1 // loop_footer
      %s24 = sadd.s32 1, %s20
    $region7: #{tpu_custom_call.1} parent=1 // loop_footer_branch
      %19 = sbr.rel target = $region3
    $region8: #{tpu_custom_call.1} parent=1 // loop_exit
      _
    %1179 = vsyncpa [#allocation3], 1
    %s1180 = scalar_lea.sflag [#allocation3], 1
    %1181 = vsyncpa %s1180, 1
    %1182 = vsyncpa [#allocation6], 1
    %1183 = vsyncpa [#allocation9], 1
    %1184 = vsyncpa [#allocation4], 1
    %s1185 = scalar_lea.sflag [#allocation4], 1
    %1186 = vsyncpa %s1185, 1

</llo_original>
